<compile_context>
chip_gen: v6e
topology: v6e:2x2x1
jax: 0.10.0
libtpu: 0.0.40
codegen_flags: <defaults>
</compile_context>

<pallas_src>
import functools

import jax
import jax.numpy as jnp
from jax import lax
from jax.experimental import pallas as pl
from jax.experimental.pallas import tpu as pltpu


def _pick_block_rows(n, preferred=128):
    cand = min(preferred, n)
    for mult in (32, 8):                      # prefer int8-friendly (32-row) tiles
        start = cand - cand % mult
        for b in range(start, 0, -mult):
            if n % b == 0:
                return b
    return n                                   # block == full dim is always legal


# ----------------------------------------------------------------------------
# Kernel 1: row-tiled per-metapath GATConv + fused semantic-attention score.
# grid = (M, N // block_rows)
# ----------------------------------------------------------------------------
def _gat_kernel(adj_ref, h_ref, w_ref, attn_l_ref, attn_r_ref, bias_ref,
                sem_w1_ref, sem_b1_ref, sem_w2_ref,
                z_ref, score_ref,
                feat_ref, el_ref,
                *, num_heads, out_size, block_rows):
    r = pl.program_id(1)

    @pl.when(r == 0)
    def _init():
        # Projection done ONCE per metapath: bf16 x bf16 -> f32 accumulate on MXU.
        feat = jnp.dot(h_ref[...], w_ref[0],
                       preferred_element_type=jnp.float32)            # (N, H*Fout)
        feat_ref[...] = feat
        attn_l = attn_l_ref[0].astype(jnp.float32)                     # (H, Fout)
        for hh in range(num_heads):
            fh = feat[:, hh * out_size:(hh + 1) * out_size]            # (N, Fout)
            al = attn_l[hh:hh + 1, :]                                   # (1, Fout)
            # el[u] = <feat_u, attn_l>; produced lane-major as (1, N), once per metapath.
            el_ref[hh:hh + 1, :] = lax.dot_general(
                al, fh, (((1,), (1,)), ((), ())),
                preferred_element_type=jnp.float32)
        score_ref[...] = jnp.zeros_like(score_ref)

    row0 = pl.multiple_of(r * block_rows, block_rows)
    mask = adj_ref[0].astype(jnp.float32) > 0.0                        # (TM, N) bool
    feat_all = feat_ref[...]                                            # (N,  H*Fout)
    feat_dst = feat_ref[pl.ds(row0, block_rows), :]                     # (TM, H*Fout)
    el_all = el_ref[...]                                                # (H, N)
    attn_r = attn_r_ref[0].astype(jnp.float32)                          # (H, Fout)

    head_outs = []
    for hh in range(num_heads):
        fh_all = feat_all[:, hh * out_size:(hh + 1) * out_size]         # (N,  Fout)
        fh_dst = feat_dst[:, hh * out_size:(hh + 1) * out_size]         # (TM, Fout)
        ar = attn_r[hh:hh + 1, :]                                        # (1, Fout)

        # er[v] = <feat_v, attn_r>  -- VPU broadcast-multiply + lane reduce.
        er = jnp.sum(fh_dst * ar, axis=1, keepdims=True)                 # (TM, 1)
        el = el_all[hh:hh + 1, :]                                        # (1, N)

        # S[v, u] = leaky_relu(el[u] + er[v], 0.2) for edge u -> v
        s = er + el                                                      # (TM, N)
        s = jnp.where(s > 0, s, 0.2 * s)

        # masked edge-softmax over incoming edges (source axis is fully resident).
        masked = jnp.where(mask, s, jnp.float32(-1e30))
        mx = jnp.max(masked, axis=1, keepdims=True)                      # (TM, 1)
        p = jnp.where(mask, jnp.exp(masked - mx), 0.0)                   # (TM, N)
        denom = jnp.sum(p, axis=1, keepdims=True)
        # allow_zero_in_degree=True: zero rows -> all-zero alpha -> output 0
        alpha = p / jnp.where(denom > 0, denom, jnp.float32(1.0))

        # rst[v] = sum_u alpha[v, u] * feat[u]
        head_outs.append(jnp.dot(alpha, fh_all,
                                 preferred_element_type=jnp.float32))    # (TM, Fout)

    out_tile = jnp.concatenate(head_outs, axis=1)                        # (TM, H*Fout)
    out_tile = out_tile + bias_ref[0].astype(jnp.float32)
    # ELU (alpha=1); exp branch discarded by where (safe in f32).
    out_tile = jnp.where(out_tile > 0, out_tile, jnp.exp(out_tile) - 1.0)
    z_ref[0] = out_tile.astype(z_ref.dtype)

    # Fused semantic-attention score contribution for this row tile:
    #   score[m] += sum_rows( tanh(z W1 + b1) . w2 )
    proj = jnp.tanh(jnp.dot(out_tile, sem_w1_ref[...],
                            preferred_element_type=jnp.float32)
                    + sem_b1_ref[...])                                   # (TM, hidden)
    tile_score = jnp.sum(proj * sem_w2_ref[...])                         # scalar (VPU + reduce)
    score_ref[...] = score_ref[...] + tile_score


def gat_per_metapath(adj_t_i8, h, W, attn_l, attn_r, bias,
                     sem_w1, sem_b1, sem_w2, *,
                     num_heads, out_size, block_rows=None):
    M, N, _ = adj_t_i8.shape
    Fin = h.shape[1]
    D = num_heads * out_size
    hidden = sem_w1.shape[1]
    if block_rows is None:
        block_rows = _pick_block_rows(N)
    assert N % block_rows == 0
    n_row_tiles = N // block_rows

    kernel = functools.partial(_gat_kernel, num_heads=num_heads,
                               out_size=out_size, block_rows=block_rows)

    flops = 2 * M * (N * Fin * D + num_heads * N * N * out_size + N * D * hidden)
    transcendentals = M * (num_heads * N * N + N * D + N * hidden)
    bytes_accessed = (M * N * N * int(adj_t_i8.dtype.itemsize)
                      + N * Fin * int(h.dtype.itemsize)
                      + M * Fin * D * int(W.dtype.itemsize)
                      + M * N * D * 4 + M * 4)

    return pl.pallas_call(
        kernel,
        out_shape=(jax.ShapeDtypeStruct((M, N, D), jnp.float32),
                   jax.ShapeDtypeStruct((M, 1, 1), jnp.float32)),
        grid_spec=pltpu.PrefetchScalarGridSpec(
            num_scalar_prefetch=0,
            grid=(M, n_row_tiles),
            in_specs=[
                pl.BlockSpec((1, block_rows, N), lambda m, r: (m, r, 0)),   # adj (int8)
                pl.BlockSpec((N, Fin), lambda m, r: (0, 0)),                # h (stays resident)
                pl.BlockSpec((1, Fin, D), lambda m, r: (m, 0, 0)),          # W
                pl.BlockSpec((1, num_heads, out_size), lambda m, r: (m, 0, 0)),
                pl.BlockSpec((1, num_heads, out_size), lambda m, r: (m, 0, 0)),
                pl.BlockSpec((1, 1, D), lambda m, r: (m, 0, 0)),            # bias
                pl.BlockSpec((D, hidden), lambda m, r: (0, 0)),             # sem W1
                pl.BlockSpec((1, hidden), lambda m, r: (0, 0)),             # sem b1
                pl.BlockSpec((1, hidden), lambda m, r: (0, 0)),             # sem w2 (row)
            ],
            out_specs=[
                pl.BlockSpec((1, block_rows, D), lambda m, r: (m, r, 0)),   # z
                pl.BlockSpec((1, 1, 1), lambda m, r: (m, 0, 0)),            # score (accumulated)
            ],
            scratch_shapes=[
                pltpu.VMEM((N, D), jnp.float32),          # feat = h @ W[m], reused across tiles
                pltpu.VMEM((num_heads, N), jnp.float32),  # el per head, reused across tiles
            ],
        ),
        compiler_params=pltpu.CompilerParams(
            dimension_semantics=("parallel", "arbitrary"),
            vmem_limit_bytes=32 * 1024 * 1024),
        cost_estimate=pl.CostEstimate(flops=flops,
                                      transcendentals=transcendentals,
                                      bytes_accessed=bytes_accessed),
    )(adj_t_i8, h, W, attn_l, attn_r, bias, sem_w1, sem_b1, sem_w2)


# ----------------------------------------------------------------------------
# Kernel 2: weighted fusion  out = sum_m beta[m] * z[m], tiled over rows.
# beta (M,) lives in SMEM via scalar prefetch.
# ----------------------------------------------------------------------------
def _fuse_kernel(beta_ref, z_ref, out_ref, *, num_mp):
    acc = beta_ref[0] * z_ref[0].astype(jnp.float32)
    for m in range(1, num_mp):
        acc = acc + beta_ref[m] * z_ref[m].astype(jnp.float32)
    out_ref[...] = acc.astype(out_ref.dtype)


def fuse_metapaths(z, beta, *, block_rows=None):
    M, N, D = z.shape
    if block_rows is None:
        block_rows = _pick_block_rows(N)
    assert N % block_rows == 0
    kernel = functools.partial(_fuse_kernel, num_mp=M)
    flops = 2 * M * N * D
    bytes_accessed = M * N * D * 4 + N * D * 4 + M * 4
    return pl.pallas_call(
        kernel,
        out_shape=jax.ShapeDtypeStruct((N, D), jnp.float32),
        grid_spec=pltpu.PrefetchScalarGridSpec(
            num_scalar_prefetch=1,                       # beta -> SMEM
            grid=(N // block_rows,),
            in_specs=[pl.BlockSpec((M, block_rows, D), lambda r, beta: (0, r, 0))],
            out_specs=pl.BlockSpec((block_rows, D), lambda r, beta: (r, 0)),
        ),
        compiler_params=pltpu.CompilerParams(
            dimension_semantics=("parallel",),
            vmem_limit_bytes=32 * 1024 * 1024),
        cost_estimate=pl.CostEstimate(flops=flops, transcendentals=0,
                                      bytes_accessed=bytes_accessed),
    )(beta, z)


# ----------------------------------------------------------------------------
# HANLayer wrapper
# ----------------------------------------------------------------------------
def han_layer_forward(params, adj_t_i8, h, gamma=None, *,
                      num_heads, out_size, block_rows=None):
    # TODO(synk): gamma is accepted for API parity with HANLayer.forward and ignored.
    del gamma
    N = h.shape[0]
    z, score = gat_per_metapath(
        adj_t_i8, h, params["W"], params["attn_l"], params["attn_r"], params["bias"],
        params["sem_w1"], params["sem_b1"], params["sem_w2"],
        num_heads=num_heads, out_size=out_size, block_rows=block_rows)
    # Semantic attention weights: M scalars -> plain JAX (softmax over metapaths).
    w_mp = score[:, 0, 0] / jnp.float32(N)
    beta = jax.nn.softmax(w_mp).astype(jnp.float32)
    return fuse_metapaths(z, beta, block_rows=block_rows)


# ----------------------------------------------------------------------------
# Pure-JAX reference (same math) for correctness check.
# ----------------------------------------------------------------------------
def reference(params, adj_t_i8, h, *, num_heads, out_size):
    M = adj_t_i8.shape[0]
    adj = adj_t_i8.astype(jnp.float32)
    hf = h.astype(jnp.float32)
    zs = []
    for m in range(M):
        feat = hf @ params["W"][m].astype(jnp.float32)
        heads = []
        for hh in range(num_heads):
            fh = feat[:, hh * out_size:(hh + 1) * out_size]
            el = fh @ params["attn_l"][m, hh]
            er = fh @ params["attn_r"][m, hh]
            s = er[:, None] + el[None, :]
            s = jnp.where(s > 0, s, 0.2 * s)
            mask = adj[m]
            masked = jnp.where(mask > 0, s, -1e30)
            mx = masked.max(axis=1, keepdims=True)
            p = jnp.exp(masked - mx) * mask
            denom = p.sum(axis=1, keepdims=True)
            alpha = p / jnp.where(denom > 0, denom, 1.0)
            heads.append(alpha @ fh)
        out = jnp.concatenate(heads, axis=1) + params["bias"][m, 0]
        out = jnp.where(out > 0, out, jnp.exp(out) - 1.0)
        zs.append(out)
    z = jnp.stack(zs)                                                  # (M, N, D)
    proj = jnp.tanh(z @ params["sem_w1"] + params["sem_b1"])           # (M, N, hidden)
    s = jnp.sum(proj * params["sem_w2"][None], axis=-1)                # (M, N)
    w_mp = s.mean(axis=1)
    beta = jax.nn.softmax(w_mp)
    return (beta[:, None, None] * z).sum(0)


if __name__ == "__main__":
    # Small deterministic example consistent with HANLayer.__init__:
    #   M metapaths, in_size=32, out_size=8, layer_num_heads=2, dropout -> eval (identity).
    # N=128 with block_rows=64 exercises the multi-row-tile path (feat/el/score carry).
    N, Fin, Fout, H, M = 128, 32, 8, 2, 3
    D = H * Fout
    HIDDEN = 128            # SemanticAttention default hidden_size
    BLOCK_ROWS = 64

    key = jax.random.PRNGKey(0)
    ks = jax.random.split(key, 10)

    h = (0.5 * jax.random.normal(ks[0], (N, Fin), jnp.float32)).astype(jnp.bfloat16)
    # metapath-reachable graphs as dense transposed adjacency (dst, src); include self loops.
    adj = jax.random.uniform(ks[1], (M, N, N)) < 0.1
    adj_t = jnp.transpose(adj, (0, 2, 1)) | jnp.eye(N, dtype=bool)[None]
    adj_t_i8 = adj_t.astype(jnp.int8)                     # 1-byte adjacency in HBM

    params = {
        "W": (0.1 * jax.random.normal(ks[2], (M, Fin, D), jnp.float32)).astype(jnp.bfloat16),
        "attn_l": 0.1 * jax.random.normal(ks[3], (M, H, Fout), jnp.float32),
        "attn_r": 0.1 * jax.random.normal(ks[4], (M, H, Fout), jnp.float32),
        "bias": 0.01 * jax.random.normal(ks[5], (M, 1, D), jnp.float32),
        "sem_w1": 0.1 * jax.random.normal(ks[6], (D, HIDDEN), jnp.float32),
        "sem_b1": 0.01 * jax.random.normal(ks[7], (1, HIDDEN), jnp.float32),
        "sem_w2": 0.1 * jax.random.normal(ks[8], (1, HIDDEN), jnp.float32),
    }

    out = han_layer_forward(params, adj_t_i8, h, gamma=1.0,
                            num_heads=H, out_size=Fout, block_rows=BLOCK_ROWS)
    out = jax.block_until_ready(out)

    with jax.default_matmul_precision("highest"):
        ref = jax.block_until_ready(reference(params, adj_t_i8, h,
                                              num_heads=H, out_size=Fout))

    assert out.shape == (N, D)
    assert bool(jnp.all(jnp.isfinite(out)))
    assert bool(jnp.allclose(out, ref, rtol=2e-2, atol=2e-2)), "mismatch vs reference"

    print("KERNEL_OK")
</pallas_src>

<mosaic_0001>
module attributes {stable_mosaic.version = 11 : i64} {
  func.func @_gat_kernel(%arg0: i32, %arg1: i32, %arg2: memref<1x64x128xi8, #tpu.memory_space<vmem>>, %arg3: memref<128x32xbf16, #tpu.memory_space<vmem>>, %arg4: memref<1x32x16xbf16, #tpu.memory_space<vmem>>, %arg5: memref<1x2x8xf32, #tpu.memory_space<vmem>>, %arg6: memref<1x2x8xf32, #tpu.memory_space<vmem>>, %arg7: memref<1x1x16xf32, #tpu.memory_space<vmem>>, %arg8: memref<16x128xf32, #tpu.memory_space<vmem>>, %arg9: memref<1x128xf32, #tpu.memory_space<vmem>>, %arg10: memref<1x128xf32, #tpu.memory_space<vmem>>, %arg11: memref<1x64x16xf32, #tpu.memory_space<vmem>>, %arg12: memref<1x1x1xf32, #tpu.memory_space<vmem>>, %arg13: memref<128x16xf32, #tpu.memory_space<vmem>>, %arg14: memref<2x128xf32, #tpu.memory_space<vmem>>) attributes {dimension_semantics = [#tpu.dimension_semantics<parallel>, #tpu.dimension_semantics<arbitrary>], iteration_bounds = array<i64: 3, 2>, scalar_prefetch = 0 : i64, scratch_operands = 2 : i64, tpu.core_type = #tpu.core_type<tc>, window_params = [{transform_indices = @transform_0, window_bounds = array<i64: 1, 64, 128>}, {pipeline_mode = #tpu.pipeline_mode<synchronous>, transform_indices = @transform_1, window_bounds = array<i64: 128, 32>}, {transform_indices = @transform_2, window_bounds = array<i64: 1, 32, 16>}, {transform_indices = @transform_3, window_bounds = array<i64: 1, 2, 8>}, {transform_indices = @transform_4, window_bounds = array<i64: 1, 2, 8>}, {transform_indices = @transform_5, window_bounds = array<i64: 1, 1, 16>}, {pipeline_mode = #tpu.pipeline_mode<synchronous>, transform_indices = @transform_6, window_bounds = array<i64: 16, 128>}, {pipeline_mode = #tpu.pipeline_mode<synchronous>, transform_indices = @transform_7, window_bounds = array<i64: 1, 128>}, {pipeline_mode = #tpu.pipeline_mode<synchronous>, transform_indices = @transform_8, window_bounds = array<i64: 1, 128>}, {transform_indices = @transform_9, window_bounds = array<i64: 1, 64, 16>}, {transform_indices = @transform_10, window_bounds = array<i64: 1, 1, 1>}]} {
    %c0_i32 = arith.constant 0 : i32
    %0 = arith.cmpi eq, %arg1, %c0_i32 : i32
    %1 = arith.extui %0 : i1 to i32
    %c0_i32_0 = arith.constant 0 : i32
    %2 = arith.cmpi ne, %1, %c0_i32_0 : i32
    scf.if %2 {
      %c0_53 = arith.constant 0 : index
      %c0_54 = arith.constant 0 : index
      %115 = vector.load %arg3[%c0_53, %c0_54] : memref<128x32xbf16, #tpu.memory_space<vmem>>, vector<128x32xbf16>
      %c0_55 = arith.constant 0 : index
      %c0_56 = arith.constant 0 : index
      %c0_57 = arith.constant 0 : index
      %116 = vector.load %arg4[%c0_55, %c0_56, %c0_57] : memref<1x32x16xbf16, #tpu.memory_space<vmem>>, vector<1x32x16xbf16>
      %117 = vector.shape_cast %116 : vector<1x32x16xbf16> to vector<32x16xbf16>
      %cst_58 = arith.constant dense<0.000000e+00> : vector<128x16xf32>
      %118 = tpu.matmul %115, %117, %cst_58 {dimension_numbers = #tpu.dot_dimension_numbers<[1], [0], [0], [1], [0, 0, 1, 1], [], []>} : vector<128x32xbf16>, vector<32x16xbf16>, vector<128x16xf32> -> vector<128x16xf32>
      %c0_59 = arith.constant 0 : index
      %c0_60 = arith.constant 0 : index
      %119 = vector.load %arg13[%c0_59, %c0_60] : memref<128x16xf32, #tpu.memory_space<vmem>>, vector<128x16xf32>
      tpu.vector_store %arg13[%c0_59, %c0_60], %118 {strides = array<i32>} : memref<128x16xf32, #tpu.memory_space<vmem>>, vector<128x16xf32>,
      %c0_61 = arith.constant 0 : index
      %c0_62 = arith.constant 0 : index
      %c0_63 = arith.constant 0 : index
      %120 = vector.load %arg5[%c0_61, %c0_62, %c0_63] : memref<1x2x8xf32, #tpu.memory_space<vmem>>, vector<1x2x8xf32>
      %121 = vector.shape_cast %120 : vector<1x2x8xf32> to vector<2x8xf32>
      %122 = vector.extract_strided_slice %118 {offsets = [0, 0], sizes = [128, 8], strides = [1, 1]} : vector<128x16xf32> to vector<128x8xf32>
      %123 = vector.extract_strided_slice %121 {offsets = [0, 0], sizes = [1, 8], strides = [1, 1]} : vector<2x8xf32> to vector<1x8xf32>
      %cst_64 = arith.constant dense<0.000000e+00> : vector<1x128xf32>
      %124 = tpu.matmul %123, %122, %cst_64 {dimension_numbers = #tpu.dot_dimension_numbers<[1], [1], [0], [0], [0, 0, 1, 0], [], []>} : vector<1x8xf32>, vector<128x8xf32>, vector<1x128xf32> -> vector<1x128xf32>
      %c0_65 = arith.constant 0 : index
      %c0_66 = arith.constant 0 : index
      %125 = vector.load %arg14[%c0_65, %c0_66] : memref<2x128xf32, #tpu.memory_space<vmem>>, vector<1x128xf32>
      tpu.vector_store %arg14[%c0_65, %c0_66], %124 {strides = array<i32>} : memref<2x128xf32, #tpu.memory_space<vmem>>, vector<1x128xf32>,
      %126 = vector.extract_strided_slice %118 {offsets = [0, 8], sizes = [128, 8], strides = [1, 1]} : vector<128x16xf32> to vector<128x8xf32>
      %127 = vector.extract_strided_slice %121 {offsets = [1, 0], sizes = [1, 8], strides = [1, 1]} : vector<2x8xf32> to vector<1x8xf32>
      %cst_67 = arith.constant dense<0.000000e+00> : vector<1x128xf32>
      %128 = tpu.matmul %127, %126, %cst_67 {dimension_numbers = #tpu.dot_dimension_numbers<[1], [1], [0], [0], [0, 0, 1, 0], [], []>} : vector<1x8xf32>, vector<128x8xf32>, vector<1x128xf32> -> vector<1x128xf32>
      %c1 = arith.constant 1 : index
      %c0_68 = arith.constant 0 : index
      %129 = vector.load %arg14[%c1, %c0_68] : memref<2x128xf32, #tpu.memory_space<vmem>>, vector<1x128xf32>
      tpu.vector_store %arg14[%c1, %c0_68], %128 {strides = array<i32>} : memref<2x128xf32, #tpu.memory_space<vmem>>, vector<1x128xf32>,
      %cst_69 = arith.constant 0.000000e+00 : f32
      %130 = vector.broadcast %cst_69 : f32 to vector<1x1x1xf32>
      %c0_70 = arith.constant 0 : index
      %c0_71 = arith.constant 0 : index
      %c0_72 = arith.constant 0 : index
      %131 = vector.load %arg12[%c0_70, %c0_71, %c0_72] : memref<1x1x1xf32, #tpu.memory_space<vmem>>, vector<1x1x1xf32>
      tpu.vector_store %arg12[%c0_70, %c0_71, %c0_72], %130 {strides = array<i32>} : memref<1x1x1xf32, #tpu.memory_space<vmem>>, vector<1x1x1xf32>,
    } else {
    }
    %c64_i32 = arith.constant 64 : i32
    %3 = arith.muli %arg1, %c64_i32 : i32
    %4 = tpu.assume_multiple %3, 64 : i32
    %c0 = arith.constant 0 : index
    %c0_1 = arith.constant 0 : index
    %c0_2 = arith.constant 0 : index
    %5 = vector.load %arg2[%c0, %c0_1, %c0_2] : memref<1x64x128xi8, #tpu.memory_space<vmem>>, vector<1x64x128xi8>
    %6 = vector.shape_cast %5 : vector<1x64x128xi8> to vector<64x128xi8>
    %7 = arith.sitofp %6 : vector<64x128xi8> to vector<64x128xf32>
    %cst = arith.constant 0.000000e+00 : f32
    %8 = vector.broadcast %cst : f32 to vector<64x128xf32>
    %9 = arith.cmpf ogt, %7, %8 : vector<64x128xf32>
    %c0_3 = arith.constant 0 : index
    %c0_4 = arith.constant 0 : index
    %10 = vector.load %arg13[%c0_3, %c0_4] : memref<128x16xf32, #tpu.memory_space<vmem>>, vector<128x16xf32>
    %11 = arith.index_cast %4 : i32 to index
    %c0_5 = arith.constant 0 : index
    %12 = vector.load %arg13[%11, %c0_5] : memref<128x16xf32, #tpu.memory_space<vmem>>, vector<64x16xf32>
    %c0_6 = arith.constant 0 : index
    %c0_7 = arith.constant 0 : index
    %13 = vector.load %arg14[%c0_6, %c0_7] : memref<2x128xf32, #tpu.memory_space<vmem>>, vector<2x128xf32>
    %c0_8 = arith.constant 0 : index
    %c0_9 = arith.constant 0 : index
    %c0_10 = arith.constant 0 : index
    %14 = vector.load %arg6[%c0_8, %c0_9, %c0_10] : memref<1x2x8xf32, #tpu.memory_space<vmem>>, vector<1x2x8xf32>
    %15 = vector.shape_cast %14 : vector<1x2x8xf32> to vector<2x8xf32>
    %16 = vector.extract_strided_slice %10 {offsets = [0, 0], sizes = [128, 8], strides = [1, 1]} : vector<128x16xf32> to vector<128x8xf32>
    %17 = vector.extract_strided_slice %12 {offsets = [0, 0], sizes = [64, 8], strides = [1, 1]} : vector<64x16xf32> to vector<64x8xf32>
    %18 = vector.extract_strided_slice %15 {offsets = [0, 0], sizes = [1, 8], strides = [1, 1]} : vector<2x8xf32> to vector<1x8xf32>
    %19 = vector.broadcast %18 : vector<1x8xf32> to vector<64x8xf32>
    %20 = arith.mulf %17, %19 : vector<64x8xf32>
    %cst_11 = arith.constant dense<0.000000e+00> : vector<64xf32>
    %21 = vector.multi_reduction <add>, %20, %cst_11 [1] : vector<64x8xf32> to vector<64xf32>
    %22 = vector.shape_cast %21 : vector<64xf32> to vector<64x1xf32>
    %23 = vector.extract_strided_slice %13 {offsets = [0, 0], sizes = [1, 128], strides = [1, 1]} : vector<2x128xf32> to vector<1x128xf32>
    %24 = vector.broadcast %22 : vector<64x1xf32> to vector<64x128xf32>
    %25 = vector.broadcast %23 : vector<1x128xf32> to vector<64x128xf32>
    %26 = arith.addf %24, %25 : vector<64x128xf32>
    %cst_12 = arith.constant 0.000000e+00 : f32
    %27 = vector.broadcast %cst_12 : f32 to vector<64x128xf32>
    %28 = arith.cmpf ogt, %26, %27 : vector<64x128xf32>
    %cst_13 = arith.constant 2.000000e-01 : f32
    %29 = vector.broadcast %cst_13 : f32 to vector<64x128xf32>
    %30 = arith.mulf %29, %26 : vector<64x128xf32>
    %31 = arith.select %28, %26, %30 : vector<64x128xi1>, vector<64x128xf32>
    %cst_14 = arith.constant -1.000000e+30 : f32
    %32 = vector.broadcast %cst_14 : f32 to vector<64x128xf32>
    %33 = arith.select %9, %31, %32 : vector<64x128xi1>, vector<64x128xf32>
    %cst_15 = arith.constant dense<0xFF800000> : vector<64xf32>
    %34 = vector.multi_reduction <maximumf>, %33, %cst_15 [1] : vector<64x128xf32> to vector<64xf32>
    %35 = vector.shape_cast %34 : vector<64xf32> to vector<64x1xf32>
    %36 = vector.broadcast %35 : vector<64x1xf32> to vector<64x128xf32>
    %37 = arith.subf %33, %36 : vector<64x128xf32>
    %38 = math.exp %37 : vector<64x128xf32>
    %cst_16 = arith.constant 0.000000e+00 : f32
    %39 = vector.broadcast %cst_16 : f32 to vector<64x128xf32>
    %40 = arith.select %9, %38, %39 : vector<64x128xi1>, vector<64x128xf32>
    %cst_17 = arith.constant dense<0.000000e+00> : vector<64xf32>
    %41 = vector.multi_reduction <add>, %40, %cst_17 [1] : vector<64x128xf32> to vector<64xf32>
    %42 = vector.shape_cast %41 : vector<64xf32> to vector<64x1xf32>
    %cst_18 = arith.constant 0.000000e+00 : f32
    %43 = vector.broadcast %cst_18 : f32 to vector<64x1xf32>
    %44 = arith.cmpf ogt, %42, %43 : vector<64x1xf32>
    %cst_19 = arith.constant 1.000000e+00 : f32
    %45 = vector.broadcast %cst_19 : f32 to vector<64x1xf32>
    %46 = arith.select %44, %42, %45 : vector<64x1xi1>, vector<64x1xf32>
    %47 = vector.broadcast %46 : vector<64x1xf32> to vector<64x128xf32>
    %48 = arith.divf %40, %47 : vector<64x128xf32>
    %cst_20 = arith.constant dense<0.000000e+00> : vector<64x8xf32>
    %49 = tpu.matmul %48, %16, %cst_20 {dimension_numbers = #tpu.dot_dimension_numbers<[1], [0], [0], [1], [0, 0, 1, 1], [], []>} : vector<64x128xf32>, vector<128x8xf32>, vector<64x8xf32> -> vector<64x8xf32>
    %50 = vector.extract_strided_slice %10 {offsets = [0, 8], sizes = [128, 8], strides = [1, 1]} : vector<128x16xf32> to vector<128x8xf32>
    %51 = vector.extract_strided_slice %12 {offsets = [0, 8], sizes = [64, 8], strides = [1, 1]} : vector<64x16xf32> to vector<64x8xf32>
    %52 = vector.extract_strided_slice %15 {offsets = [1, 0], sizes = [1, 8], strides = [1, 1]} : vector<2x8xf32> to vector<1x8xf32>
    %53 = vector.broadcast %52 : vector<1x8xf32> to vector<64x8xf32>
    %54 = arith.mulf %51, %53 : vector<64x8xf32>
    %cst_21 = arith.constant dense<0.000000e+00> : vector<64xf32>
    %55 = vector.multi_reduction <add>, %54, %cst_21 [1] : vector<64x8xf32> to vector<64xf32>
    %56 = vector.shape_cast %55 : vector<64xf32> to vector<64x1xf32>
    %57 = vector.extract_strided_slice %13 {offsets = [1, 0], sizes = [1, 128], strides = [1, 1]} : vector<2x128xf32> to vector<1x128xf32>
    %58 = vector.broadcast %56 : vector<64x1xf32> to vector<64x128xf32>
    %59 = vector.broadcast %57 : vector<1x128xf32> to vector<64x128xf32>
    %60 = arith.addf %58, %59 : vector<64x128xf32>
    %cst_22 = arith.constant 0.000000e+00 : f32
    %61 = vector.broadcast %cst_22 : f32 to vector<64x128xf32>
    %62 = arith.cmpf ogt, %60, %61 : vector<64x128xf32>
    %cst_23 = arith.constant 2.000000e-01 : f32
    %63 = vector.broadcast %cst_23 : f32 to vector<64x128xf32>
    %64 = arith.mulf %63, %60 : vector<64x128xf32>
    %65 = arith.select %62, %60, %64 : vector<64x128xi1>, vector<64x128xf32>
    %cst_24 = arith.constant -1.000000e+30 : f32
    %66 = vector.broadcast %cst_24 : f32 to vector<64x128xf32>
    %67 = arith.select %9, %65, %66 : vector<64x128xi1>, vector<64x128xf32>
    %cst_25 = arith.constant dense<0xFF800000> : vector<64xf32>
    %68 = vector.multi_reduction <maximumf>, %67, %cst_25 [1] : vector<64x128xf32> to vector<64xf32>
    %69 = vector.shape_cast %68 : vector<64xf32> to vector<64x1xf32>
    %70 = vector.broadcast %69 : vector<64x1xf32> to vector<64x128xf32>
    %71 = arith.subf %67, %70 : vector<64x128xf32>
    %72 = math.exp %71 : vector<64x128xf32>
    %cst_26 = arith.constant 0.000000e+00 : f32
    %73 = vector.broadcast %cst_26 : f32 to vector<64x128xf32>
    %74 = arith.select %9, %72, %73 : vector<64x128xi1>, vector<64x128xf32>
    %cst_27 = arith.constant dense<0.000000e+00> : vector<64xf32>
    %75 = vector.multi_reduction <add>, %74, %cst_27 [1] : vector<64x128xf32> to vector<64xf32>
    %76 = vector.shape_cast %75 : vector<64xf32> to vector<64x1xf32>
    %cst_28 = arith.constant 0.000000e+00 : f32
    %77 = vector.broadcast %cst_28 : f32 to vector<64x1xf32>
    %78 = arith.cmpf ogt, %76, %77 : vector<64x1xf32>
    %cst_29 = arith.constant 1.000000e+00 : f32
    %79 = vector.broadcast %cst_29 : f32 to vector<64x1xf32>
    %80 = arith.select %78, %76, %79 : vector<64x1xi1>, vector<64x1xf32>
    %81 = vector.broadcast %80 : vector<64x1xf32> to vector<64x128xf32>
    %82 = arith.divf %74, %81 : vector<64x128xf32>
    %cst_30 = arith.constant dense<0.000000e+00> : vector<64x8xf32>
    %83 = tpu.matmul %82, %50, %cst_30 {dimension_numbers = #tpu.dot_dimension_numbers<[1], [0], [0], [1], [0, 0, 1, 1], [], []>} : vector<64x128xf32>, vector<128x8xf32>, vector<64x8xf32> -> vector<64x8xf32>
    %84 = tpu.concatenate %49, %83 in 1 : vector<64x8xf32>, vector<64x8xf32> -> vector<64x16xf32>
    %c0_31 = arith.constant 0 : index
    %c0_32 = arith.constant 0 : index
    %c0_33 = arith.constant 0 : index
    %85 = vector.load %arg7[%c0_31, %c0_32, %c0_33] : memref<1x1x16xf32, #tpu.memory_space<vmem>>, vector<1x1x16xf32>
    %86 = vector.shape_cast %85 : vector<1x1x16xf32> to vector<1x16xf32>
    %87 = vector.broadcast %86 : vector<1x16xf32> to vector<64x16xf32>
    %88 = arith.addf %84, %87 : vector<64x16xf32>
    %cst_34 = arith.constant 0.000000e+00 : f32
    %89 = vector.broadcast %cst_34 : f32 to vector<64x16xf32>
    %90 = arith.cmpf ogt, %88, %89 : vector<64x16xf32>
    %91 = math.exp %88 : vector<64x16xf32>
    %cst_35 = arith.constant 1.000000e+00 : f32
    %92 = vector.broadcast %cst_35 : f32 to vector<64x16xf32>
    %93 = arith.subf %91, %92 : vector<64x16xf32>
    %94 = arith.select %90, %88, %93 : vector<64x16xi1>, vector<64x16xf32>
    %c0_36 = arith.constant 0 : index
    %c0_37 = arith.constant 0 : index
    %c0_38 = arith.constant 0 : index
    %95 = vector.load %arg11[%c0_36, %c0_37, %c0_38] : memref<1x64x16xf32, #tpu.memory_space<vmem>>, vector<1x64x16xf32>
    %96 = vector.shape_cast %95 : vector<1x64x16xf32> to vector<64x16xf32>
    %97 = vector.shape_cast %94 : vector<64x16xf32> to vector<1x64x16xf32>
    tpu.vector_store %arg11[%c0_36, %c0_37, %c0_38], %97 {strides = array<i32>} : memref<1x64x16xf32, #tpu.memory_space<vmem>>, vector<1x64x16xf32>,
    %c0_39 = arith.constant 0 : index
    %c0_40 = arith.constant 0 : index
    %98 = vector.load %arg8[%c0_39, %c0_40] : memref<16x128xf32, #tpu.memory_space<vmem>>, vector<16x128xf32>
    %cst_41 = arith.constant dense<0.000000e+00> : vector<64x128xf32>
    %99 = tpu.matmul %94, %98, %cst_41 {dimension_numbers = #tpu.dot_dimension_numbers<[1], [0], [0], [1], [0, 0, 1, 1], [], []>} : vector<64x16xf32>, vector<16x128xf32>, vector<64x128xf32> -> vector<64x128xf32>
    %c0_42 = arith.constant 0 : index
    %c0_43 = arith.constant 0 : index
    %100 = vector.load %arg9[%c0_42, %c0_43] : memref<1x128xf32, #tpu.memory_space<vmem>>, vector<1x128xf32>
    %101 = vector.broadcast %100 : vector<1x128xf32> to vector<64x128xf32>
    %102 = arith.addf %99, %101 : vector<64x128xf32>
    %103 = math.tanh %102 : vector<64x128xf32>
    %c0_44 = arith.constant 0 : index
    %c0_45 = arith.constant 0 : index
    %104 = vector.load %arg10[%c0_44, %c0_45] : memref<1x128xf32, #tpu.memory_space<vmem>>, vector<1x128xf32>
    %105 = vector.broadcast %104 : vector<1x128xf32> to vector<64x128xf32>
    %106 = arith.mulf %103, %105 : vector<64x128xf32>
    %107 = vector.shape_cast %106 : vector<64x128xf32> to vector<1x64x128xf32>
    %cst_46 = arith.constant dense<0.000000e+00> : vector<1xf32>
    %108 = vector.multi_reduction <add>, %107, %cst_46 [1, 2] : vector<1x64x128xf32> to vector<1xf32>
    %109 = vector.shape_cast %108 : vector<1xf32> to vector<1x1x1xf32>
    %110 = vector.extract %109[0, 0, 0] : f32 from vector<1x1x1xf32>
    %c0_47 = arith.constant 0 : index
    %c0_48 = arith.constant 0 : index
    %c0_49 = arith.constant 0 : index
    %111 = vector.load %arg12[%c0_47, %c0_48, %c0_49] : memref<1x1x1xf32, #tpu.memory_space<vmem>>, vector<1x1x1xf32>
    %112 = vector.broadcast %110 : f32 to vector<1x1x1xf32>
    %113 = arith.addf %111, %112 : vector<1x1x1xf32>
    %c0_50 = arith.constant 0 : index
    %c0_51 = arith.constant 0 : index
    %c0_52 = arith.constant 0 : index
    %114 = vector.load %arg12[%c0_50, %c0_51, %c0_52] : memref<1x1x1xf32, #tpu.memory_space<vmem>>, vector<1x1x1xf32>
    tpu.vector_store %arg12[%c0_50, %c0_51, %c0_52], %113 {strides = array<i32>} : memref<1x1x1xf32, #tpu.memory_space<vmem>>, vector<1x1x1xf32>,
    return
  }
  func.func @transform_0(%arg0: i32, %arg1: i32) -> (i32, i32, i32) {
    %c0_i32 = arith.constant 0 : i32
    %c0_i32_0 = arith.constant 0 : i32
    return %arg0, %arg1, %c0_i32 : i32, i32, i32
  }
  func.func @transform_1(%arg0: i32, %arg1: i32) -> (i32, i32) {
    %c0_i32 = arith.constant 0 : i32
    %c0_i32_0 = arith.constant 0 : i32
    %c0_i32_1 = arith.constant 0 : i32
    return %c0_i32, %c0_i32_0 : i32, i32
  }
  func.func @transform_2(%arg0: i32, %arg1: i32) -> (i32, i32, i32) {
    %c0_i32 = arith.constant 0 : i32
    %c0_i32_0 = arith.constant 0 : i32
    %c0_i32_1 = arith.constant 0 : i32
    return %arg0, %c0_i32, %c0_i32_0 : i32, i32, i32
  }
  func.func @transform_3(%arg0: i32, %arg1: i32) -> (i32, i32, i32) {
    %c0_i32 = arith.constant 0 : i32
    %c0_i32_0 = arith.constant 0 : i32
    %c0_i32_1 = arith.constant 0 : i32
    return %arg0, %c0_i32, %c0_i32_0 : i32, i32, i32
  }
  func.func @transform_4(%arg0: i32, %arg1: i32) -> (i32, i32, i32) {
    %c0_i32 = arith.constant 0 : i32
    %c0_i32_0 = arith.constant 0 : i32
    %c0_i32_1 = arith.constant 0 : i32
    return %arg0, %c0_i32, %c0_i32_0 : i32, i32, i32
  }
  func.func @transform_5(%arg0: i32, %arg1: i32) -> (i32, i32, i32) {
    %c0_i32 = arith.constant 0 : i32
    %c0_i32_0 = arith.constant 0 : i32
    %c0_i32_1 = arith.constant 0 : i32
    return %arg0, %c0_i32, %c0_i32_0 : i32, i32, i32
  }
  func.func @transform_6(%arg0: i32, %arg1: i32) -> (i32, i32) {
    %c0_i32 = arith.constant 0 : i32
    %c0_i32_0 = arith.constant 0 : i32
    %c0_i32_1 = arith.constant 0 : i32
    return %c0_i32, %c0_i32_0 : i32, i32
  }
  func.func @transform_7(%arg0: i32, %arg1: i32) -> (i32, i32) {
    %c0_i32 = arith.constant 0 : i32
    %c0_i32_0 = arith.constant 0 : i32
    %c0_i32_1 = arith.constant 0 : i32
    return %c0_i32, %c0_i32_0 : i32, i32
  }
  func.func @transform_8(%arg0: i32, %arg1: i32) -> (i32, i32) {
    %c0_i32 = arith.constant 0 : i32
    %c0_i32_0 = arith.constant 0 : i32
    %c0_i32_1 = arith.constant 0 : i32
    return %c0_i32, %c0_i32_0 : i32, i32
  }
  func.func @transform_9(%arg0: i32, %arg1: i32) -> (i32, i32, i32) {
    %c0_i32 = arith.constant 0 : i32
    %c0_i32_0 = arith.constant 0 : i32
    return %arg0, %arg1, %c0_i32 : i32, i32, i32
  }
  func.func @transform_10(%arg0: i32, %arg1: i32) -> (i32, i32, i32) {
    %c0_i32 = arith.constant 0 : i32
    %c0_i32_0 = arith.constant 0 : i32
    %c0_i32_1 = arith.constant 0 : i32
    return %arg0, %c0_i32, %c0_i32_0 : i32, i32, i32
  }
}

</mosaic_0001>

<llo_original>
// kernel: tpu_custom_call.1
$region0: #{tpu_custom_call.1}
  #allocation0 [shape = 'u32[]', space=smem, size = 0x4, offset = 0x4, fixed_abs, tag = 'smem constant byte address 0x4 - core index']
  #allocation1 [shape = 'u32[144,128]{1,0:T(1,128)}', space=vmem, size = 0x12000, scoped, tag = 'internal scratch']
  #allocation2 [shape = 'f32[128,16]{1,0:T(8,128)}', space=vmem, size = 0x10000, scoped, tag = 'scratch operand']
  #allocation3 [shape = 'f32[2,128]{1,0:T(2,128)}', space=vmem, size = 0x400, scoped, tag = 'scratch operand']
  %s0 = inlined_call_operand.vmem [shape: s8[3,128,128], index: 0, kind: input, shape index: {}]
  %s1 = inlined_call_operand.vmem [shape: bf16[128,32], index: 1, kind: input, shape index: {}]
  %s2 = inlined_call_operand.vmem [shape: bf16[3,32,16], index: 2, kind: input, shape index: {}]
  %s3 = inlined_call_operand.vmem [shape: f32[3,2,8], index: 3, kind: input, shape index: {}]
  %s4 = inlined_call_operand.vmem [shape: f32[3,2,8], index: 4, kind: input, shape index: {}]
  %s5 = inlined_call_operand.vmem [shape: f32[3,1,16], index: 5, kind: input, shape index: {}]
  %s6 = inlined_call_operand.vmem [shape: f32[16,128], index: 6, kind: input, shape index: {}]
  %s7 = inlined_call_operand.vmem [shape: f32[1,128], index: 7, kind: input, shape index: {}]
  %s8 = inlined_call_operand.vmem [shape: f32[1,128], index: 8, kind: input, shape index: {}]
  %s9 = inlined_call_operand.vmem [shape: f32[3,128,16], index: 9, kind: output, shape index: {0}]
  %s10 = inlined_call_operand.vmem [shape: f32[3,1,1], index: 10, kind: output, shape index: {1}]
  %11 = xla_tuple %s9, %s10
  %s12 = sld [smem:[#allocation0]]
  $region81: #{tpu_custom_call.1} parent=0
    _
  %s14 = ssub.s32 1, %s12
  %s15 = scalar_select 0, %s14, %s12
  loop: start=0, step=1, limit=8
  $region2: #{tpu_custom_call.1} parent=0 // loop_pre_header
    _
  $region3: #{tpu_custom_call.1} parent=0 // loop_header
    %s17 = sphi 0, %s21
    %p18 = scmp.ge.s32.totalorder %s17, 8
    %s24 = sphi 0, %s36
    %s25 = sphi 0, %s32
    %s26 = sphi 0, %s24
    %s27 = sphi 0, %s25
    %s28 = sphi 0, %s26
    %s29 = sphi 0, %s27
    %s41 = sphi 0, %s43
    %s44 = sphi 0, %s41
    %s45 = sphi 0, %s44
    %s61 = sphi 0, %s45
    %s65 = sphi 0, %s65
    %s67 = sphi 0, %s65
    %s68 = sphi 0, %s67
    %s82 = sphi 0, %s68
    %s88 = sphi 0, %s90
    %s91 = sphi 0, %s88
    %s92 = sphi 0, %s91
    %s108 = sphi 0, %s92
    %s114 = sphi 0, %s116
    %s117 = sphi 0, %s114
    %s118 = sphi 0, %s117
    %s134 = sphi 0, %s118
    %s140 = sphi 0, %s142
    %s143 = sphi 0, %s140
    %s144 = sphi 0, %s143
    %s160 = sphi 0, %s144
    %s166 = sphi 0, %s168
    %s169 = sphi 0, %s166
    %s170 = sphi 0, %s169
    %s186 = sphi 0, %s170
    %s190 = sphi 0, %s190
    %s192 = sphi 0, %s190
    %s193 = sphi 0, %s192
    %s207 = sphi 0, %s193
    %s211 = sphi 0, %s211
    %s213 = sphi 0, %s211
    %s214 = sphi 0, %s213
    %s228 = sphi 0, %s214
    %s232 = sphi 0, %s232
    %s234 = sphi 0, %s232
    %s235 = sphi 0, %s234
    %s249 = sphi 0, %s235
    %s257 = sphi 0, %s259
    %s260 = sphi 0, %s257
    %s261 = sphi 0, %s260
    %s277 = sphi 0, %s261
    %s283 = sphi 0, %s285
    %s286 = sphi 0, %s283
    %s287 = sphi 0, %s286
    %s303 = sphi 0, %s287
  $region4: #{tpu_custom_call.1} parent=0 // loop_header_branch
    %20 = sbr.rel (%p18) target = $region8
  $region5: #{tpu_custom_call.1} parent=0 // loop_body
    %s22 = ssub.s32 %s17, 1
    %s23 = ssub.s32 %s17, 2
    %s30 = sadd.s32 1, %s25
    %p31 = scmp.ge.s32.totalorder %s30, 2
    %s32 = scalar_select %p31, 0, %s30
    %s33 = sadd.s32 1, %s24
    %s34 = scalar_select %p31, %s33, %s24
    %p35 = scmp.ge.s32.totalorder %s34, 3
    %s36 = scalar_select %p35, 0, %s34
    %s37 = ssub.s32 %s24, %s36
    %s38 = ssub.s32 %s25, %s32
    %s39 = sor.u32 %s37, %s38
    %p40 = scmp.eq.s32.totalorder %s39, 0
    %s42 = sadd.s32 %s41, 1
    %s43 = scalar_select %p40, %s41, %s42
    %p46 = pneg %p40
    %p47 = scmp.eq.s32.totalorder %s17, 5
    %p48 = por %p46, %p47
    %p49 = scmp.ne.s32.totalorder %s41, %s44
    %p50 = scmp.eq.s32.totalorder %s17, 0
    %p51 = por %p49, %p50
    %p52 = scmp.ne.s32.totalorder %s41, %s44
    %p53 = scmp.eq.s32.totalorder %s22, 5
    %p54 = por %p52, %p53
    %p55 = scmp.ne.s32.totalorder %s44, %s45
    %p56 = scmp.eq.s32.totalorder %s22, 0
    %p57 = por %p55, %p56
    %p58 = scmp.ne.s32.totalorder %s44, %s45
    %p59 = scmp.eq.s32.totalorder %s23, 5
    %p60 = por %p58, %p59
    %p62 = scmp.ne.s32.totalorder %s45, %s61
    %p63 = scmp.eq.s32.totalorder %s23, 0
    %p64 = por %p62, %p63
    %s66 = sadd.s32 %s65, 1
    %p69 = scmp.eq.s32.totalorder %s17, 5
    %p70 = scmp.ne.s32.totalorder %s65, %s67
    %p71 = scmp.eq.s32.totalorder %s17, 0
    %p72 = por %p70, %p71
    %p73 = scmp.ne.s32.totalorder %s65, %s67
    %p74 = scmp.eq.s32.totalorder %s22, 5
    %p75 = por %p73, %p74
    %p76 = scmp.ne.s32.totalorder %s67, %s68
    %p77 = scmp.eq.s32.totalorder %s22, 0
    %p78 = por %p76, %p77
    %p79 = scmp.ne.s32.totalorder %s67, %s68
    %p80 = scmp.eq.s32.totalorder %s23, 5
    %p81 = por %p79, %p80
    %p83 = scmp.ne.s32.totalorder %s68, %s82
    %p84 = scmp.eq.s32.totalorder %s23, 0
    %p85 = por %p83, %p84
    %s86 = ssub.s32 %s24, %s36
    %p87 = scmp.eq.s32.totalorder %s86, 0
    %s89 = sadd.s32 %s88, 1
    %s90 = scalar_select %p87, %s88, %s89
    %p93 = pneg %p87
    %p94 = scmp.eq.s32.totalorder %s17, 5
    %p95 = por %p93, %p94
    %p96 = scmp.ne.s32.totalorder %s88, %s91
    %p97 = scmp.eq.s32.totalorder %s17, 0
    %p98 = por %p96, %p97
    %p99 = scmp.ne.s32.totalorder %s88, %s91
    %p100 = scmp.eq.s32.totalorder %s22, 5
    %p101 = por %p99, %p100
    %p102 = scmp.ne.s32.totalorder %s91, %s92
    %p103 = scmp.eq.s32.totalorder %s22, 0
    %p104 = por %p102, %p103
    %p105 = scmp.ne.s32.totalorder %s91, %s92
    %p106 = scmp.eq.s32.totalorder %s23, 5
    %p107 = por %p105, %p106
    %p109 = scmp.ne.s32.totalorder %s92, %s108
    %p110 = scmp.eq.s32.totalorder %s23, 0
    %p111 = por %p109, %p110
    %s112 = ssub.s32 %s24, %s36
    %p113 = scmp.eq.s32.totalorder %s112, 0
    %s115 = sadd.s32 %s114, 1
    %s116 = scalar_select %p113, %s114, %s115
    %p119 = pneg %p113
    %p120 = scmp.eq.s32.totalorder %s17, 5
    %p121 = por %p119, %p120
    %p122 = scmp.ne.s32.totalorder %s114, %s117
    %p123 = scmp.eq.s32.totalorder %s17, 0
    %p124 = por %p122, %p123
    %p125 = scmp.ne.s32.totalorder %s114, %s117
    %p126 = scmp.eq.s32.totalorder %s22, 5
    %p127 = por %p125, %p126
    %p128 = scmp.ne.s32.totalorder %s117, %s118
    %p129 = scmp.eq.s32.totalorder %s22, 0
    %p130 = por %p128, %p129
    %p131 = scmp.ne.s32.totalorder %s117, %s118
    %p132 = scmp.eq.s32.totalorder %s23, 5
    %p133 = por %p131, %p132
    %p135 = scmp.ne.s32.totalorder %s118, %s134
    %p136 = scmp.eq.s32.totalorder %s23, 0
    %p137 = por %p135, %p136
    %s138 = ssub.s32 %s24, %s36
    %p139 = scmp.eq.s32.totalorder %s138, 0
    %s141 = sadd.s32 %s140, 1
    %s142 = scalar_select %p139, %s140, %s141
    %p145 = pneg %p139
    %p146 = scmp.eq.s32.totalorder %s17, 5
    %p147 = por %p145, %p146
    %p148 = scmp.ne.s32.totalorder %s140, %s143
    %p149 = scmp.eq.s32.totalorder %s17, 0
    %p150 = por %p148, %p149
    %p151 = scmp.ne.s32.totalorder %s140, %s143
    %p152 = scmp.eq.s32.totalorder %s22, 5
    %p153 = por %p151, %p152
    %p154 = scmp.ne.s32.totalorder %s143, %s144
    %p155 = scmp.eq.s32.totalorder %s22, 0
    %p156 = por %p154, %p155
    %p157 = scmp.ne.s32.totalorder %s143, %s144
    %p158 = scmp.eq.s32.totalorder %s23, 5
    %p159 = por %p157, %p158
    %p161 = scmp.ne.s32.totalorder %s144, %s160
    %p162 = scmp.eq.s32.totalorder %s23, 0
    %p163 = por %p161, %p162
    %s164 = ssub.s32 %s24, %s36
    %p165 = scmp.eq.s32.totalorder %s164, 0
    %s167 = sadd.s32 %s166, 1
    %s168 = scalar_select %p165, %s166, %s167
    %p171 = pneg %p165
    %p172 = scmp.eq.s32.totalorder %s17, 5
    %p173 = por %p171, %p172
    %p174 = scmp.ne.s32.totalorder %s166, %s169
    %p175 = scmp.eq.s32.totalorder %s17, 0
    %p176 = por %p174, %p175
    %p177 = scmp.ne.s32.totalorder %s166, %s169
    %p178 = scmp.eq.s32.totalorder %s22, 5
    %p179 = por %p177, %p178
    %p180 = scmp.ne.s32.totalorder %s169, %s170
    %p181 = scmp.eq.s32.totalorder %s22, 0
    %p182 = por %p180, %p181
    %p183 = scmp.ne.s32.totalorder %s169, %s170
    %p184 = scmp.eq.s32.totalorder %s23, 5
    %p185 = por %p183, %p184
    %p187 = scmp.ne.s32.totalorder %s170, %s186
    %p188 = scmp.eq.s32.totalorder %s23, 0
    %p189 = por %p187, %p188
    %s191 = sadd.s32 %s190, 1
    %p194 = scmp.eq.s32.totalorder %s17, 5
    %p195 = scmp.ne.s32.totalorder %s190, %s192
    %p196 = scmp.eq.s32.totalorder %s17, 0
    %p197 = por %p195, %p196
    %p198 = scmp.ne.s32.totalorder %s190, %s192
    %p199 = scmp.eq.s32.totalorder %s22, 5
    %p200 = por %p198, %p199
    %p201 = scmp.ne.s32.totalorder %s192, %s193
    %p202 = scmp.eq.s32.totalorder %s22, 0
    %p203 = por %p201, %p202
    %p204 = scmp.ne.s32.totalorder %s192, %s193
    %p205 = scmp.eq.s32.totalorder %s23, 5
    %p206 = por %p204, %p205
    %p208 = scmp.ne.s32.totalorder %s193, %s207
    %p209 = scmp.eq.s32.totalorder %s23, 0
    %p210 = por %p208, %p209
    %s212 = sadd.s32 %s211, 1
    %p215 = scmp.eq.s32.totalorder %s17, 5
    %p216 = scmp.ne.s32.totalorder %s211, %s213
    %p217 = scmp.eq.s32.totalorder %s17, 0
    %p218 = por %p216, %p217
    %p219 = scmp.ne.s32.totalorder %s211, %s213
    %p220 = scmp.eq.s32.totalorder %s22, 5
    %p221 = por %p219, %p220
    %p222 = scmp.ne.s32.totalorder %s213, %s214
    %p223 = scmp.eq.s32.totalorder %s22, 0
    %p224 = por %p222, %p223
    %p225 = scmp.ne.s32.totalorder %s213, %s214
    %p226 = scmp.eq.s32.totalorder %s23, 5
    %p227 = por %p225, %p226
    %p229 = scmp.ne.s32.totalorder %s214, %s228
    %p230 = scmp.eq.s32.totalorder %s23, 0
    %p231 = por %p229, %p230
    %s233 = sadd.s32 %s232, 1
    %p236 = scmp.eq.s32.totalorder %s17, 5
    %p237 = scmp.ne.s32.totalorder %s232, %s234
    %p238 = scmp.eq.s32.totalorder %s17, 0
    %p239 = por %p237, %p238
    %p240 = scmp.ne.s32.totalorder %s232, %s234
    %p241 = scmp.eq.s32.totalorder %s22, 5
    %p242 = por %p240, %p241
    %p243 = scmp.ne.s32.totalorder %s234, %s235
    %p244 = scmp.eq.s32.totalorder %s22, 0
    %p245 = por %p243, %p244
    %p246 = scmp.ne.s32.totalorder %s234, %s235
    %p247 = scmp.eq.s32.totalorder %s23, 5
    %p248 = por %p246, %p247
    %p250 = scmp.ne.s32.totalorder %s235, %s249
    %p251 = scmp.eq.s32.totalorder %s23, 0
    %p252 = por %p250, %p251
    %s253 = ssub.s32 %s24, %s36
    %s254 = ssub.s32 %s25, %s32
    %s255 = sor.u32 %s253, %s254
    %p256 = scmp.eq.s32.totalorder %s255, 0
    %s258 = sadd.s32 %s257, 1
    %s259 = scalar_select %p256, %s257, %s258
    %p262 = pneg %p256
    %p263 = scmp.eq.s32.totalorder %s17, 5
    %p264 = por %p262, %p263
    %p265 = scmp.ne.s32.totalorder %s257, %s260
    %p266 = scmp.eq.s32.totalorder %s17, 0
    %p267 = por %p265, %p266
    %p268 = scmp.ne.s32.totalorder %s257, %s260
    %p269 = scmp.eq.s32.totalorder %s22, 5
    %p270 = por %p268, %p269
    %p271 = scmp.ne.s32.totalorder %s260, %s261
    %p272 = scmp.eq.s32.totalorder %s22, 0
    %p273 = por %p271, %p272
    %p274 = scmp.ne.s32.totalorder %s260, %s261
    %p275 = scmp.eq.s32.totalorder %s23, 5
    %p276 = por %p274, %p275
    %p278 = scmp.ne.s32.totalorder %s261, %s277
    %p279 = scmp.eq.s32.totalorder %s23, 0
    %p280 = por %p278, %p279
    %s281 = ssub.s32 %s24, %s36
    %p282 = scmp.eq.s32.totalorder %s281, 0
    %s284 = sadd.s32 %s283, 1
    %s285 = scalar_select %p282, %s283, %s284
    %p288 = pneg %p282
    %p289 = scmp.eq.s32.totalorder %s17, 5
    %p290 = por %p288, %p289
    %p291 = scmp.ne.s32.totalorder %s283, %s286
    %p292 = scmp.eq.s32.totalorder %s17, 0
    %p293 = por %p291, %p292
    %p294 = scmp.ne.s32.totalorder %s283, %s286
    %p295 = scmp.eq.s32.totalorder %s22, 5
    %p296 = por %p294, %p295
    %p297 = scmp.ne.s32.totalorder %s286, %s287
    %p298 = scmp.eq.s32.totalorder %s22, 0
    %p299 = por %p297, %p298
    %p300 = scmp.ne.s32.totalorder %s286, %s287
    %p301 = scmp.eq.s32.totalorder %s23, 5
    %p302 = por %p300, %p301
    %p304 = scmp.ne.s32.totalorder %s287, %s303
    %p305 = scmp.eq.s32.totalorder %s23, 0
    %p306 = por %p304, %p305
    %p307 = scmp.le.s32.totalorder 1, %s17
    %p308 = scmp.lt.s32.totalorder %s17, 7
    %p309 = pnand %p307, %p308
    %p310 = pneg %p309
    // Predicated region
    $region9: #{tpu_custom_call.1} parent=5 // pred_check
      _
    $region10: #{tpu_custom_call.1} parent=5 // pred_check_branch
      %312 = sbr.rel (%p309) target = $region12
    $region11: #{tpu_custom_call.1} parent=5 // pred_region
      %s313 = ssub.s32 %s17, 1
      // Predicated region
      $region13: #{tpu_custom_call.1} parent=11 // pred_check
        %p314 = pneg %p78
      $region14: #{tpu_custom_call.1} parent=11 // pred_check_branch
        %316 = sbr.rel (%p314) target = $region16
      $region15: #{tpu_custom_call.1} parent=11 // pred_region
        _
      $region16: #{tpu_custom_call.1} parent=11 // pred_fallthru
        _
      // Predicated region
      $region17: #{tpu_custom_call.1} parent=11 // pred_check
        %p317 = pneg %p203
      $region18: #{tpu_custom_call.1} parent=11 // pred_check_branch
        %319 = sbr.rel (%p317) target = $region20
      $region19: #{tpu_custom_call.1} parent=11 // pred_region
        _
      $region20: #{tpu_custom_call.1} parent=11 // pred_fallthru
        _
      // Predicated region
      $region21: #{tpu_custom_call.1} parent=11 // pred_check
        %p320 = pneg %p224
      $region22: #{tpu_custom_call.1} parent=11 // pred_check_branch
        %322 = sbr.rel (%p320) target = $region24
      $region23: #{tpu_custom_call.1} parent=11 // pred_region
        _
      $region24: #{tpu_custom_call.1} parent=11 // pred_fallthru
        _
      // Predicated region
      $region25: #{tpu_custom_call.1} parent=11 // pred_check
        %p323 = pneg %p245
      $region26: #{tpu_custom_call.1} parent=11 // pred_check_branch
        %325 = sbr.rel (%p323) target = $region28
      $region27: #{tpu_custom_call.1} parent=11 // pred_region
        _
      $region28: #{tpu_custom_call.1} parent=11 // pred_fallthru
        _
    $region12: #{tpu_custom_call.1} parent=5 // pred_fallthru
      _
    %p326 = scmp.lt.s32.totalorder %s17, 6
    // Predicated region
    $region29: #{tpu_custom_call.1} parent=5 // pred_check
      %p327 = pneg %p326
    $region30: #{tpu_custom_call.1} parent=5 // pred_check_branch
      %329 = sbr.rel (%p327) target = $region32
    $region31: #{tpu_custom_call.1} parent=5 // pred_region
      // Predicated region
      $region33: #{tpu_custom_call.1} parent=31 // pred_check
        %p330 = pneg %p51
      $region34: #{tpu_custom_call.1} parent=31 // pred_check_branch
        %332 = sbr.rel (%p330) target = $region36
      $region35: #{tpu_custom_call.1} parent=31 // pred_region
        %s333 = smul.u32 2, %s25
        %p334 = scmp.lt.s32.totalorder %s24, 2
        %s335 = scalar_select %p334, %s24, 2
        %p336 = scmp.lt.s32.totalorder %s333, 3
        %s337 = scalar_select %p336, %s333, 3
        %s338 = smul.addr %s335, 4
        %s339 = sadd.s32 %s337, %s338
        %s340 = smul.addr %s339, 8
        %s341 = scalar_lea.vmem %s0, %s340
        %s342 = smul.u32 2, %s25
      $region36: #{tpu_custom_call.1} parent=31 // pred_fallthru
        _
      // Predicated region
      $region37: #{tpu_custom_call.1} parent=31 // pred_check
        %p343 = pneg %p98
      $region38: #{tpu_custom_call.1} parent=31 // pred_check_branch
        %345 = sbr.rel (%p343) target = $region40
      $region39: #{tpu_custom_call.1} parent=31 // pred_region
        %p346 = scmp.lt.s32.totalorder %s24, 2
        %s347 = scalar_select %p346, %s24, 2
        %s348 = smul.addr %s347, 4
        %s349 = smul.addr %s348, 4
        %s350 = scalar_lea.vmem %s2, %s349
      $region40: #{tpu_custom_call.1} parent=31 // pred_fallthru
        _
      // Predicated region
      $region41: #{tpu_custom_call.1} parent=31 // pred_check
        %p351 = pneg %p124
      $region42: #{tpu_custom_call.1} parent=31 // pred_check_branch
        %353 = sbr.rel (%p351) target = $region44
      $region43: #{tpu_custom_call.1} parent=31 // pred_region
        %p354 = scmp.lt.s32.totalorder %s24, 2
        %s355 = scalar_select %p354, %s24, 2
        %s356 = smul.addr %s355, 2
        %s357 = scalar_lea.vmem %s3, %s356
      $region44: #{tpu_custom_call.1} parent=31 // pred_fallthru
        _
      // Predicated region
      $region45: #{tpu_custom_call.1} parent=31 // pred_check
        %p358 = pneg %p150
      $region46: #{tpu_custom_call.1} parent=31 // pred_check_branch
        %360 = sbr.rel (%p358) target = $region48
      $region47: #{tpu_custom_call.1} parent=31 // pred_region
        %p361 = scmp.lt.s32.totalorder %s24, 2
        %s362 = scalar_select %p361, %s24, 2
        %s363 = smul.addr %s362, 2
        %s364 = scalar_lea.vmem %s4, %s363
      $region48: #{tpu_custom_call.1} parent=31 // pred_fallthru
        _
      // Predicated region
      $region49: #{tpu_custom_call.1} parent=31 // pred_check
        %p365 = pneg %p176
      $region50: #{tpu_custom_call.1} parent=31 // pred_check_branch
        %367 = sbr.rel (%p365) target = $region52
      $region51: #{tpu_custom_call.1} parent=31 // pred_region
        %p368 = scmp.lt.s32.totalorder %s24, 2
        %s369 = scalar_select %p368, %s24, 2
        %s370 = scalar_lea.vmem %s5, %s369
      $region52: #{tpu_custom_call.1} parent=31 // pred_fallthru
        _
    $region32: #{tpu_custom_call.1} parent=5 // pred_fallthru
      _
    %p371 = scmp.le.s32.totalorder 1, %s17
    %p372 = scmp.lt.s32.totalorder %s17, 7
    %p373 = pnand %p371, %p372
    %p374 = pneg %p373
    // Predicated region
    $region53: #{tpu_custom_call.1} parent=5 // pred_check
      _
    $region54: #{tpu_custom_call.1} parent=5 // pred_check_branch
      %376 = sbr.rel (%p373) target = $region56
    $region55: #{tpu_custom_call.1} parent=5 // pred_region
      %s377 = ssub.s32 %s17, 1
      %s378 = smul.u32 2, %s27
      %p379 = scmp.lt.s32.totalorder %s26, 2
      %s380 = scalar_select %p379, %s26, 2
      %p381 = scmp.lt.s32.totalorder %s378, 3
      %s382 = scalar_select %p381, %s378, 3
      %s383 = smul.addr %s380, 4
      %s384 = sadd.s32 %s382, %s383
      %s385 = smul.addr %s384, 8
      %s386 = scalar_lea.vmem %s0, %s385
      %p387 = pneg %p57
      %p388 = pneg %p54
      %p389 = pneg %p78
      %p390 = pneg %p75
      %p391 = scmp.lt.s32.totalorder %s26, 2
      %s392 = scalar_select %p391, %s26, 2
      %s393 = smul.addr %s392, 4
      %s394 = smul.addr %s393, 4
      %s395 = scalar_lea.vmem %s2, %s394
      %p396 = pneg %p104
      %p397 = pneg %p101
      %p398 = scmp.lt.s32.totalorder %s26, 2
      %s399 = scalar_select %p398, %s26, 2
      %s400 = smul.addr %s399, 2
      %s401 = scalar_lea.vmem %s3, %s400
      %p402 = pneg %p130
      %p403 = pneg %p127
      %p404 = scmp.lt.s32.totalorder %s26, 2
      %s405 = scalar_select %p404, %s26, 2
      %s406 = smul.addr %s405, 2
      %s407 = scalar_lea.vmem %s4, %s406
      %p408 = pneg %p156
      %p409 = pneg %p153
      %p410 = scmp.lt.s32.totalorder %s26, 2
      %s411 = scalar_select %p410, %s26, 2
      %s412 = scalar_lea.vmem %s5, %s411
      %p413 = pneg %p182
      %p414 = pneg %p179
      %p415 = pneg %p203
      %p416 = pneg %p200
      %p417 = pneg %p224
      %p418 = pneg %p221
      %p419 = pneg %p245
      %p420 = pneg %p242
      %p421 = pneg %p273
      %p422 = pneg %p270
      %s423 = smul.u32 8, %s27
      %p424 = scmp.lt.s32.totalorder %s26, 2
      %s425 = scalar_select %p424, %s26, 2
      %p426 = scmp.lt.s32.totalorder %s423, 15
      %s427 = scalar_select %p426, %s423, 15
      %s428 = smul.addr %s425, 16
      %s429 = sadd.s32 %s427, %s428
      %s430 = smul.addr %s429, 8
      %s431 = scalar_lea.vmem %s9, %s430
      %p432 = pneg %p299
      %p433 = pneg %p296
      %p434 = scmp.lt.s32.totalorder %s26, 2
      %s435 = scalar_select %p434, %s26, 2
      %s436 = scalar_lea.vmem %s10, %s435
      %s437 = smul.u32 2, %s27
      %p438 = scmp.lt.s32.totalorder %s26, 2
      %s439 = scalar_select %p438, %s26, 2
      %p440 = scmp.lt.s32.totalorder %s437, 3
      %s441 = scalar_select %p440, %s437, 3
      %s442 = smul.addr %s439, 4
      %s443 = sadd.s32 %s441, %s442
      %s444 = smul.addr %s443, 8
      %s445 = scalar_lea.vmem %s0, %s444
      %s446 = smul.u32 2, %s27
      %p447 = scmp.lt.s32.totalorder %s26, 2
      %s448 = scalar_select %p447, %s26, 2
      %s449 = smul.addr %s448, 4
      %s450 = smul.addr %s449, 4
      %s451 = scalar_lea.vmem %s2, %s450
      %p452 = scmp.lt.s32.totalorder %s26, 2
      %s453 = scalar_select %p452, %s26, 2
      %s454 = smul.addr %s453, 2
      %s455 = scalar_lea.vmem %s3, %s454
      %p456 = scmp.lt.s32.totalorder %s26, 2
      %s457 = scalar_select %p456, %s26, 2
      %s458 = smul.addr %s457, 2
      %s459 = scalar_lea.vmem %s4, %s458
      %p460 = scmp.lt.s32.totalorder %s26, 2
      %s461 = scalar_select %p460, %s26, 2
      %s462 = scalar_lea.vmem %s5, %s461
      %s463 = smul.u32 8, %s27
      %p464 = scmp.lt.s32.totalorder %s26, 2
      %s465 = scalar_select %p464, %s26, 2
      %p466 = scmp.lt.s32.totalorder %s463, 15
      %s467 = scalar_select %p466, %s463, 15
      %s468 = smul.addr %s465, 16
      %s469 = sadd.s32 %s467, %s468
      %s470 = smul.addr %s469, 8
      %s471 = scalar_lea.vmem %s9, %s470
      %s472 = smul.u32 8, %s27
      %p473 = scmp.lt.s32.totalorder %s26, 2
      %s474 = scalar_select %p473, %s26, 2
      %s475 = scalar_lea.vmem %s10, %s474
      %p477 = scmp.eq.s32.totalorder %s27, 0
      // Predicated region
      $region57: #{tpu_custom_call.1} parent=55 // pred_check
        %p478 = pneg %p477
      $region58: #{tpu_custom_call.1} parent=55 // pred_check_branch
        %480 = sbr.rel (%p478) target = $region60
      $region59: #{tpu_custom_call.1} parent=55 // pred_region
        %v481 = vld [vmem:[%s1] sm:$0xf]
        %v482 = vld [vmem:[%s1 + $0x4] sm:$0xf]
        %v483 = vld [vmem:[%s1 + $0x8] sm:$0xf]
        %v484 = vld [vmem:[%s1 + $0xc] sm:$0xf]
        %v485 = vld [vmem:[%s1 + $0x10] sm:$0xf]
        %v486 = vld [vmem:[%s1 + $0x14] sm:$0xf]
        %v487 = vld [vmem:[%s1 + $0x18] sm:$0xf]
        %v488 = vld [vmem:[%s1 + $0x1c] sm:$0xf]
        %v489 = vld [vmem:[%s1 + $0x20] sm:$0xf]
        %v490 = vld [vmem:[%s1 + $0x24] sm:$0xf]
        %v491 = vld [vmem:[%s1 + $0x28] sm:$0xf]
        %v492 = vld [vmem:[%s1 + $0x2c] sm:$0xf]
        %v493 = vld [vmem:[%s1 + $0x30] sm:$0xf]
        %v494 = vld [vmem:[%s1 + $0x34] sm:$0xf]
        %v495 = vld [vmem:[%s1 + $0x38] sm:$0xf]
        %v496 = vld [vmem:[%s1 + $0x3c] sm:$0xf]
        %v497 = vld [vmem:[%s451] sm:$0xf]
        %v498 = vld [vmem:[%s451 + $0x4] sm:$0xf]
        %v499 = vld [vmem:[%s451 + $0x8] sm:$0xf]
        %v500 = vld [vmem:[%s451 + $0xc] sm:$0xf]
        %v517 = vunpack.c.l.b16 %v481
        %v518 = vunpack.c.l.b16 %v482
        %v519 = vunpack.c.l.b16 %v483
        %v520 = vunpack.c.l.b16 %v484
        %v521 = vunpack.c.l.b16 %v485
        %v522 = vunpack.c.l.b16 %v486
        %v523 = vunpack.c.l.b16 %v487
        %v524 = vunpack.c.l.b16 %v488
        %v525 = vunpack.c.l.b16 %v489
        %v526 = vunpack.c.l.b16 %v490
        %v527 = vunpack.c.l.b16 %v491
        %v528 = vunpack.c.l.b16 %v492
        %v529 = vunpack.c.l.b16 %v493
        %v530 = vunpack.c.l.b16 %v494
        %v531 = vunpack.c.l.b16 %v495
        %v532 = vunpack.c.l.b16 %v496
        %v533 = vpack.c.b16 %v518, %v517
        %v534 = vpack.c.b16 %v520, %v519
        %v535 = vpack.c.b16 %v522, %v521
        %v536 = vpack.c.b16 %v524, %v523
        %v537 = vpack.c.b16 %v526, %v525
        %v538 = vpack.c.b16 %v528, %v527
        %v539 = vpack.c.b16 %v530, %v529
        %v540 = vpack.c.b16 %v532, %v531
        %v545 = vunpack.c.l.b16 %v497
        %v546 = vunpack.c.l.b16 %v498
        %v547 = vunpack.c.l.b16 %v499
        %v548 = vunpack.c.l.b16 %v500
        %v549 = vpack.c.b16 %v546, %v545
        %v550 = vpack.c.b16 %v548, %v547
        %vm553 = vcmask 261120
        %v555 = vsel %vm553, %v533, 0
        %v558 = vsel %vm553, %v534, 0
        %v561 = vsel %vm553, %v535, 0
        %v564 = vsel %vm553, %v536, 0
        %v567 = vsel %vm553, %v537, 0
        %v570 = vsel %vm553, %v538, 0
        %v573 = vsel %vm553, %v539, 0
        %v576 = vsel %vm553, %v540, 0
        %578 = vmatprep.subr.bf16.mxu0 0
        %579 = vmatpush1.bf16.msra.mxu0 0
        %580 = vmatprep.subr.bf16.mxu0 0
        %581 = vmatpush1.bf16.msra.mxu0 0
        %582 = vmatprep.subr.bf16.mxu0 0
        %583 = vmatpush1.bf16.msra.mxu0 0
        %584 = vmatprep.subr.bf16.mxu0 0
        %585 = vmatpush1.bf16.msra.mxu0 0
        %586 = vmatprep.subr.bf16.mxu0 0
        %587 = vmatpush1.bf16.msra.mxu0 0
        %588 = vmatprep.subr.bf16.mxu0 0
        %589 = vmatpush1.bf16.msra.mxu0 0
        %590 = vmatprep.subr.bf16.mxu0 0
        %591 = vmatpush1.bf16.msra.mxu0 %v550
        %592 = vmatprep.subr.bf16.mxu0 0
        %593 = vmatpush1.bf16.msra.mxu0 %v549
        %594 = vmatprep.subr.bf16.mxu0 0
        %595 = vmatpush2.bf16.msra.mxu0 0
        %596 = vmatprep.subr.bf16.mxu0 0
        %597 = vmatpush2.bf16.msra.mxu0 0
        %598 = vmatprep.subr.bf16.mxu0 0
        %599 = vmatpush2.bf16.msra.mxu0 0
        %600 = vmatprep.subr.bf16.mxu0 0
        %601 = vmatpush2.bf16.msra.mxu0 0
        %602 = vmatprep.subr.bf16.mxu0 0
        %603 = vmatpush2.bf16.msra.mxu0 0
        %604 = vmatprep.subr.bf16.mxu0 0
        %605 = vmatpush2.bf16.msra.mxu0 0
        %606 = vmatprep.subr.bf16.mxu0 0
        %607 = vmatpush2.bf16.msra.mxu0 0
        %608 = vmatprep.subr.bf16.mxu0 0
        %609 = vmatpush2.bf16.msra.mxu0 0
        %610 = vmatprep.mubr.bf16.mxu0 0
        %611 = vmatmul.mubr.bf16.gmra.mxu0 %v555
        %v612 = vpop.f32.mrf.mxu0
        %v613 = vadd.f32 0.0, %v612
        %v614 = vpop.f32.mrf.mxu0
        %v615 = vpop.f32.mrf.mxu0
        %v616 = vadd.f32 0.0, %v615
        %v617 = vpop.f32.mrf.mxu0
        %618 = vmatprep.mubr.bf16.mxu0 0
        %619 = vmatmul.mubr.bf16.gmra.mxu0 %v558
        %v620 = vpop.f32.mrf.mxu0
        %v621 = vadd.f32 0.0, %v620
        %v622 = vpop.f32.mrf.mxu0
        %v623 = vpop.f32.mrf.mxu0
        %v624 = vadd.f32 0.0, %v623
        %v625 = vpop.f32.mrf.mxu0
        %626 = vmatprep.mubr.bf16.mxu0 0
        %627 = vmatmul.mubr.bf16.gmra.mxu0 %v561
        %v628 = vpop.f32.mrf.mxu0
        %v629 = vadd.f32 0.0, %v628
        %v630 = vpop.f32.mrf.mxu0
        %v631 = vpop.f32.mrf.mxu0
        %v632 = vadd.f32 0.0, %v631
        %v633 = vpop.f32.mrf.mxu0
        %634 = vmatprep.mubr.bf16.mxu0 0
        %635 = vmatmul.mubr.bf16.gmra.mxu0 %v564
        %v636 = vpop.f32.mrf.mxu0
        %v637 = vadd.f32 0.0, %v636
        %v638 = vpop.f32.mrf.mxu0
        %v639 = vpop.f32.mrf.mxu0
        %v640 = vadd.f32 0.0, %v639
        %v641 = vpop.f32.mrf.mxu0
        %642 = vmatprep.mubr.bf16.mxu0 0
        %643 = vmatmul.mubr.bf16.gmra.mxu0 %v567
        %v644 = vpop.f32.mrf.mxu0
        %v645 = vadd.f32 0.0, %v644
        %v646 = vpop.f32.mrf.mxu0
        %v647 = vpop.f32.mrf.mxu0
        %v648 = vadd.f32 0.0, %v647
        %v649 = vpop.f32.mrf.mxu0
        %650 = vmatprep.mubr.bf16.mxu0 0
        %651 = vmatmul.mubr.bf16.gmra.mxu0 %v570
        %v652 = vpop.f32.mrf.mxu0
        %v653 = vadd.f32 0.0, %v652
        %v654 = vpop.f32.mrf.mxu0
        %v655 = vpop.f32.mrf.mxu0
        %v656 = vadd.f32 0.0, %v655
        %v657 = vpop.f32.mrf.mxu0
        %658 = vmatprep.mubr.bf16.mxu0 0
        %659 = vmatmul.mubr.bf16.gmra.mxu0 %v573
        %v660 = vpop.f32.mrf.mxu0
        %v661 = vadd.f32 0.0, %v660
        %v662 = vpop.f32.mrf.mxu0
        %v663 = vpop.f32.mrf.mxu0
        %v664 = vadd.f32 0.0, %v663
        %v665 = vpop.f32.mrf.mxu0
        %666 = vmatprep.mubr.bf16.mxu0 0
        %667 = vmatmul.mubr.bf16.gmra.mxu0 %v576
        %v668 = vpop.f32.mrf.mxu0
        %v669 = vadd.f32 0.0, %v668
        %v670 = vpop.f32.mrf.mxu0
        %v671 = vpop.f32.mrf.mxu0
        %v672 = vadd.f32 0.0, %v671
        %v673 = vpop.f32.mrf.mxu0
        %674 = vdwg.mxu0
        %vm675 = vcmask 130048
        %676 = vst.msk [vmem:[#allocation2] sm:$0xff] %vm675, %v613
        %677 = vst.msk [vmem:[#allocation2 + $0x8] sm:$0xff] %vm675, %v616
        %678 = vst.msk [vmem:[#allocation2 + $0x10] sm:$0xff] %vm675, %v621
        %679 = vst.msk [vmem:[#allocation2 + $0x18] sm:$0xff] %vm675, %v624
        %680 = vst.msk [vmem:[#allocation2 + $0x20] sm:$0xff] %vm675, %v629
        %681 = vst.msk [vmem:[#allocation2 + $0x28] sm:$0xff] %vm675, %v632
        %682 = vst.msk [vmem:[#allocation2 + $0x30] sm:$0xff] %vm675, %v637
        %683 = vst.msk [vmem:[#allocation2 + $0x38] sm:$0xff] %vm675, %v640
        %684 = vst.msk [vmem:[#allocation2 + $0x40] sm:$0xff] %vm675, %v645
        %685 = vst.msk [vmem:[#allocation2 + $0x48] sm:$0xff] %vm675, %v648
        %686 = vst.msk [vmem:[#allocation2 + $0x50] sm:$0xff] %vm675, %v653
        %687 = vst.msk [vmem:[#allocation2 + $0x58] sm:$0xff] %vm675, %v656
        %688 = vst.msk [vmem:[#allocation2 + $0x60] sm:$0xff] %vm675, %v661
        %689 = vst.msk [vmem:[#allocation2 + $0x68] sm:$0xff] %vm675, %v664
        %690 = vst.msk [vmem:[#allocation2 + $0x70] sm:$0xff] %vm675, %v669
        %691 = vst.msk [vmem:[#allocation2 + $0x78] sm:$0xff] %vm675, %v672
        %v692 = vld [vmem:[%s455] sm:$0x3]
        %vm693 = vcmask 64512
        %v695 = vsel %vm693, %v692, 0
        %v698 = vsel %vm693, %v613, 0
        %v701 = vsel %vm693, %v616, 0
        %v704 = vsel %vm693, %v621, 0
        %v707 = vsel %vm693, %v624, 0
        %v710 = vsel %vm693, %v629, 0
        %v713 = vsel %vm693, %v632, 0
        %v716 = vsel %vm693, %v637, 0
        %v719 = vsel %vm693, %v640, 0
        %v722 = vsel %vm693, %v645, 0
        %v725 = vsel %vm693, %v648, 0
        %v728 = vsel %vm693, %v653, 0
        %v731 = vsel %vm693, %v656, 0
        %v734 = vsel %vm693, %v661, 0
        %v737 = vsel %vm693, %v664, 0
        %v740 = vsel %vm693, %v669, 0
        %v743 = vsel %vm693, %v672, 0
        %745 = vmatprep.subr.mxu0 0.0
        %746 = vmatpush1.xpose.msra.mxu0 %v743
        %747 = vmatprep.subr.mxu0 0.0
        %748 = vmatpush1.xpose.msra.mxu0 %v740
        %749 = vmatprep.subr.mxu0 0.0
        %750 = vmatpush1.xpose.msra.mxu0 %v737
        %751 = vmatprep.subr.mxu0 0.0
        %752 = vmatpush1.xpose.msra.mxu0 %v734
        %753 = vmatprep.subr.mxu0 0.0
        %754 = vmatpush1.xpose.msra.mxu0 %v731
        %755 = vmatprep.subr.mxu0 0.0
        %756 = vmatpush1.xpose.msra.mxu0 %v728
        %757 = vmatprep.subr.mxu0 0.0
        %758 = vmatpush1.xpose.msra.mxu0 %v725
        %759 = vmatprep.subr.mxu0 0.0
        %760 = vmatpush1.xpose.msra.mxu0 %v722
        %761 = vmatprep.subr.mxu0 0.0
        %762 = vmatpush1.xpose.msra.mxu0 %v719
        %763 = vmatprep.subr.mxu0 0.0
        %764 = vmatpush1.xpose.msra.mxu0 %v716
        %765 = vmatprep.subr.mxu0 0.0
        %766 = vmatpush1.xpose.msra.mxu0 %v713
        %767 = vmatprep.subr.mxu0 0.0
        %768 = vmatpush1.xpose.msra.mxu0 %v710
        %769 = vmatprep.subr.mxu0 0.0
        %770 = vmatpush1.xpose.msra.mxu0 %v707
        %771 = vmatprep.subr.mxu0 0.0
        %772 = vmatpush1.xpose.msra.mxu0 %v704
        %773 = vmatprep.subr.mxu0 0.0
        %774 = vmatpush1.xpose.msra.mxu0 %v701
        %775 = vmatprep.subr.mxu0 0.0
        %776 = vmatpush1.xpose.msra.mxu0 %v698
        %777 = vmatprep.subr.mxu0 0.0
        %778 = vmatpush2.xpose.msra.mxu0 0.0
        %779 = vmatprep.subr.mxu0 0.0
        %780 = vmatpush2.xpose.msra.mxu0 0.0
        %781 = vmatprep.subr.mxu0 0.0
        %782 = vmatpush2.xpose.msra.mxu0 0.0
        %783 = vmatprep.subr.mxu0 0.0
        %784 = vmatpush2.xpose.msra.mxu0 0.0
        %785 = vmatprep.subr.mxu0 0.0
        %786 = vmatpush2.xpose.msra.mxu0 0.0
        %787 = vmatprep.subr.mxu0 0.0
        %788 = vmatpush2.xpose.msra.mxu0 0.0
        %789 = vmatprep.subr.mxu0 0.0
        %790 = vmatpush2.xpose.msra.mxu0 0.0
        %791 = vmatprep.subr.mxu0 0.0
        %792 = vmatpush2.xpose.msra.mxu0 0.0
        %793 = vmatprep.subr.mxu0 0.0
        %794 = vmatpush2.xpose.msra.mxu0 0.0
        %795 = vmatprep.subr.mxu0 0.0
        %796 = vmatpush2.xpose.msra.mxu0 0.0
        %797 = vmatprep.subr.mxu0 0.0
        %798 = vmatpush2.xpose.msra.mxu0 0.0
        %799 = vmatprep.subr.mxu0 0.0
        %800 = vmatpush2.xpose.msra.mxu0 0.0
        %801 = vmatprep.subr.mxu0 0.0
        %802 = vmatpush2.xpose.msra.mxu0 0.0
        %803 = vmatprep.subr.mxu0 0.0
        %804 = vmatpush2.xpose.msra.mxu0 0.0
        %805 = vmatprep.subr.mxu0 0.0
        %806 = vmatpush2.xpose.msra.mxu0 0.0
        %807 = vmatprep.subr.mxu0 0.0
        %808 = vmatpush2.xpose.msra.mxu0 0.0
        %809 = vmatprep.mubr.f32.mxu0 0.0
        %810 = vmatmul.mubr.f32.gmra.mxu0 %v695
        %v811 = vpop.f32.mrf.mxu0
        %v812 = vadd.f32 0.0, %v811
        %v813 = vpop.f32.mrf.mxu0
        %814 = vdwg.mxu0
        %815 = vst [vmem:[#allocation3] sm:$0x1] %v812
        %v816 = vrot.slane %v692, 1
        %817 = vrot.lane.b32.xlu0 %v613, 120
        %v818 = vpop.permute.xlu0 %817
        %819 = vrot.lane.b32.xlu0 %v616, 120
        %v820 = vpop.permute.xlu0 %819
        %821 = vrot.lane.b32.xlu0 %v621, 120
        %v822 = vpop.permute.xlu0 %821
        %823 = vrot.lane.b32.xlu0 %v624, 120
        %v824 = vpop.permute.xlu0 %823
        %825 = vrot.lane.b32.xlu0 %v629, 120
        %v826 = vpop.permute.xlu0 %825
        %827 = vrot.lane.b32.xlu0 %v632, 120
        %v828 = vpop.permute.xlu0 %827
        %829 = vrot.lane.b32.xlu0 %v637, 120
        %v830 = vpop.permute.xlu0 %829
        %831 = vrot.lane.b32.xlu0 %v640, 120
        %v832 = vpop.permute.xlu0 %831
        %833 = vrot.lane.b32.xlu0 %v645, 120
        %v834 = vpop.permute.xlu0 %833
        %835 = vrot.lane.b32.xlu0 %v648, 120
        %v836 = vpop.permute.xlu0 %835
        %837 = vrot.lane.b32.xlu0 %v653, 120
        %v838 = vpop.permute.xlu0 %837
        %839 = vrot.lane.b32.xlu0 %v656, 120
        %v840 = vpop.permute.xlu0 %839
        %841 = vrot.lane.b32.xlu0 %v661, 120
        %v842 = vpop.permute.xlu0 %841
        %843 = vrot.lane.b32.xlu0 %v664, 120
        %v844 = vpop.permute.xlu0 %843
        %845 = vrot.lane.b32.xlu0 %v669, 120
        %v846 = vpop.permute.xlu0 %845
        %847 = vrot.lane.b32.xlu0 %v672, 120
        %v848 = vpop.permute.xlu0 %847
        %v849 = vsel %vm693, %v816, 0
        %v851 = vsel %vm693, %v818, 0
        %v853 = vsel %vm693, %v820, 0
        %v855 = vsel %vm693, %v822, 0
        %v857 = vsel %vm693, %v824, 0
        %v859 = vsel %vm693, %v826, 0
        %v861 = vsel %vm693, %v828, 0
        %v863 = vsel %vm693, %v830, 0
        %v865 = vsel %vm693, %v832, 0
        %v867 = vsel %vm693, %v834, 0
        %v869 = vsel %vm693, %v836, 0
        %v871 = vsel %vm693, %v838, 0
        %v873 = vsel %vm693, %v840, 0
        %v875 = vsel %vm693, %v842, 0
        %v877 = vsel %vm693, %v844, 0
        %v879 = vsel %vm693, %v846, 0
        %v881 = vsel %vm693, %v848, 0
        %883 = vmatprep.subr.mxu0 0.0
        %884 = vmatpush1.xpose.msra.mxu0 %v881
        %885 = vmatprep.subr.mxu0 0.0
        %886 = vmatpush1.xpose.msra.mxu0 %v879
        %887 = vmatprep.subr.mxu0 0.0
        %888 = vmatpush1.xpose.msra.mxu0 %v877
        %889 = vmatprep.subr.mxu0 0.0
        %890 = vmatpush1.xpose.msra.mxu0 %v875
        %891 = vmatprep.subr.mxu0 0.0
        %892 = vmatpush1.xpose.msra.mxu0 %v873
        %893 = vmatprep.subr.mxu0 0.0
        %894 = vmatpush1.xpose.msra.mxu0 %v871
        %895 = vmatprep.subr.mxu0 0.0
        %896 = vmatpush1.xpose.msra.mxu0 %v869
        %897 = vmatprep.subr.mxu0 0.0
        %898 = vmatpush1.xpose.msra.mxu0 %v867
        %899 = vmatprep.subr.mxu0 0.0
        %900 = vmatpush1.xpose.msra.mxu0 %v865
        %901 = vmatprep.subr.mxu0 0.0
        %902 = vmatpush1.xpose.msra.mxu0 %v863
        %903 = vmatprep.subr.mxu0 0.0
        %904 = vmatpush1.xpose.msra.mxu0 %v861
        %905 = vmatprep.subr.mxu0 0.0
        %906 = vmatpush1.xpose.msra.mxu0 %v859
        %907 = vmatprep.subr.mxu0 0.0
        %908 = vmatpush1.xpose.msra.mxu0 %v857
        %909 = vmatprep.subr.mxu0 0.0
        %910 = vmatpush1.xpose.msra.mxu0 %v855
        %911 = vmatprep.subr.mxu0 0.0
        %912 = vmatpush1.xpose.msra.mxu0 %v853
        %913 = vmatprep.subr.mxu0 0.0
        %914 = vmatpush1.xpose.msra.mxu0 %v851
        %915 = vmatprep.subr.mxu0 0.0
        %916 = vmatpush2.xpose.msra.mxu0 0.0
        %917 = vmatprep.subr.mxu0 0.0
        %918 = vmatpush2.xpose.msra.mxu0 0.0
        %919 = vmatprep.subr.mxu0 0.0
        %920 = vmatpush2.xpose.msra.mxu0 0.0
        %921 = vmatprep.subr.mxu0 0.0
        %922 = vmatpush2.xpose.msra.mxu0 0.0
        %923 = vmatprep.subr.mxu0 0.0
        %924 = vmatpush2.xpose.msra.mxu0 0.0
        %925 = vmatprep.subr.mxu0 0.0
        %926 = vmatpush2.xpose.msra.mxu0 0.0
        %927 = vmatprep.subr.mxu0 0.0
        %928 = vmatpush2.xpose.msra.mxu0 0.0
        %929 = vmatprep.subr.mxu0 0.0
        %930 = vmatpush2.xpose.msra.mxu0 0.0
        %931 = vmatprep.subr.mxu0 0.0
        %932 = vmatpush2.xpose.msra.mxu0 0.0
        %933 = vmatprep.subr.mxu0 0.0
        %934 = vmatpush2.xpose.msra.mxu0 0.0
        %935 = vmatprep.subr.mxu0 0.0
        %936 = vmatpush2.xpose.msra.mxu0 0.0
        %937 = vmatprep.subr.mxu0 0.0
        %938 = vmatpush2.xpose.msra.mxu0 0.0
        %939 = vmatprep.subr.mxu0 0.0
        %940 = vmatpush2.xpose.msra.mxu0 0.0
        %941 = vmatprep.subr.mxu0 0.0
        %942 = vmatpush2.xpose.msra.mxu0 0.0
        %943 = vmatprep.subr.mxu0 0.0
        %944 = vmatpush2.xpose.msra.mxu0 0.0
        %945 = vmatprep.subr.mxu0 0.0
        %946 = vmatpush2.xpose.msra.mxu0 0.0
        %947 = vmatprep.mubr.f32.mxu0 0.0
        %948 = vmatmul.mubr.f32.gmra.mxu0 %v849
        %v949 = vpop.f32.mrf.mxu0
        %v950 = vadd.f32 0.0, %v949
        %v951 = vpop.f32.mrf.mxu0
        %952 = vdwg.mxu0
        %953 = vst [vmem:[#allocation3 + $0x1] sm:$0x1] %v950
        %vm954 = vcmask 0
        %955 = vst.msk [vmem:[%s475] sm:$0x1] %vm954, 0.0
      $region60: #{tpu_custom_call.1} parent=55 // pred_fallthru
        _
      %s956 = smul.u32 %s27, 64
      %v957 = vld [vmem:[%s445] sm:$0xff]
      %v958 = vld [vmem:[%s445 + $0x8] sm:$0xff]
      %v959 = vunpack.c.0.s8 %v957
      %v960 = vunpack.c.1.s8 %v957
      %v961 = vunpack.c.2.s8 %v957
      %v962 = vunpack.c.3.s8 %v957
      %v963 = vunpack.c.0.s8 %v958
      %v964 = vunpack.c.1.s8 %v958
      %v965 = vunpack.c.2.s8 %v958
      %v966 = vunpack.c.3.s8 %v958
      %v967 = vcvt.s32.f32 %v959
      %v968 = vcvt.s32.f32 %v960
      %v969 = vcvt.s32.f32 %v961
      %v970 = vcvt.s32.f32 %v962
      %v971 = vcvt.s32.f32 %v963
      %v972 = vcvt.s32.f32 %v964
      %v973 = vcvt.s32.f32 %v965
      %v974 = vcvt.s32.f32 %v966
      %vm975 = vcmp.gt.f32.partialorder %v967, 0.0
      %vm976 = vcmp.gt.f32.partialorder %v968, 0.0
      %vm977 = vcmp.gt.f32.partialorder %v969, 0.0
      %vm978 = vcmp.gt.f32.partialorder %v970, 0.0
      %vm979 = vcmp.gt.f32.partialorder %v971, 0.0
      %vm980 = vcmp.gt.f32.partialorder %v972, 0.0
      %vm981 = vcmp.gt.f32.partialorder %v973, 0.0
      %vm982 = vcmp.gt.f32.partialorder %v974, 0.0
      %v983 = vld [vmem:[#allocation2] sm:$0xff]
      %v984 = vld [vmem:[#allocation2 + $0x8] sm:$0xff]
      %v985 = vld [vmem:[#allocation2 + $0x10] sm:$0xff]
      %v986 = vld [vmem:[#allocation2 + $0x18] sm:$0xff]
      %v987 = vld [vmem:[#allocation2 + $0x20] sm:$0xff]
      %v988 = vld [vmem:[#allocation2 + $0x28] sm:$0xff]
      %v989 = vld [vmem:[#allocation2 + $0x30] sm:$0xff]
      %v990 = vld [vmem:[#allocation2 + $0x38] sm:$0xff]
      %v991 = vld [vmem:[#allocation2 + $0x40] sm:$0xff]
      %v992 = vld [vmem:[#allocation2 + $0x48] sm:$0xff]
      %v993 = vld [vmem:[#allocation2 + $0x50] sm:$0xff]
      %v994 = vld [vmem:[#allocation2 + $0x58] sm:$0xff]
      %v995 = vld [vmem:[#allocation2 + $0x60] sm:$0xff]
      %v996 = vld [vmem:[#allocation2 + $0x68] sm:$0xff]
      %v997 = vld [vmem:[#allocation2 + $0x70] sm:$0xff]
      %v998 = vld [vmem:[#allocation2 + $0x78] sm:$0xff]
      %s999 = scalar_lea.vmem [#allocation2], %s956
      %v1000 = vld [vmem:[%s999] sm:$0xff]
      %v1001 = vld [vmem:[%s999 + $0x8] sm:$0xff]
      %v1002 = vld [vmem:[%s999 + $0x10] sm:$0xff]
      %v1003 = vld [vmem:[%s999 + $0x18] sm:$0xff]
      %v1004 = vld [vmem:[%s999 + $0x20] sm:$0xff]
      %v1005 = vld [vmem:[%s999 + $0x28] sm:$0xff]
      %v1006 = vld [vmem:[%s999 + $0x30] sm:$0xff]
      %v1007 = vld [vmem:[%s999 + $0x38] sm:$0xff]
      %v1008 = vld [vmem:[#allocation3] sm:$0x3]
      %v1009 = vld [vmem:[%s459] sm:$0x3]
      %v1010 = vlaneseq
      %v1011 = vshrl.u32 %v1010, 7
      %v1012 = vsub.s32 0, %v1011
      %v1013 = vrot.slane %v1009, %v1012
      %v1014 = vmul.f32 %v1000, %v1013
      %v1015 = vmul.f32 %v1001, %v1013
      %v1016 = vmul.f32 %v1002, %v1013
      %v1017 = vmul.f32 %v1003, %v1013
      %v1018 = vmul.f32 %v1004, %v1013
      %v1019 = vmul.f32 %v1005, %v1013
      %v1020 = vmul.f32 %v1006, %v1013
      %v1021 = vmul.f32 %v1007, %v1013
      %vm1022 = vcmask 64512
      %v1023 = vsel %vm1022, %v1014, 0.0
      %1024 = vadd.xlane.f32.xlu0 %v1023
      %v1025 = vpop.xlane.xlu0 %1024
      %v1026 = vsel %vm1022, %v1015, 0.0
      %1027 = vadd.xlane.f32.xlu0 %v1026
      %v1028 = vpop.xlane.xlu0 %1027
      %v1029 = vsel %vm1022, %v1016, 0.0
      %1030 = vadd.xlane.f32.xlu0 %v1029
      %v1031 = vpop.xlane.xlu0 %1030
      %v1032 = vsel %vm1022, %v1017, 0.0
      %1033 = vadd.xlane.f32.xlu0 %v1032
      %v1034 = vpop.xlane.xlu0 %1033
      %v1035 = vsel %vm1022, %v1018, 0.0
      %1036 = vadd.xlane.f32.xlu0 %v1035
      %v1037 = vpop.xlane.xlu0 %1036
      %v1038 = vsel %vm1022, %v1019, 0.0
      %1039 = vadd.xlane.f32.xlu0 %v1038
      %v1040 = vpop.xlane.xlu0 %1039
      %v1041 = vsel %vm1022, %v1020, 0.0
      %1042 = vadd.xlane.f32.xlu0 %v1041
      %v1043 = vpop.xlane.xlu0 %1042
      %v1044 = vsel %vm1022, %v1021, 0.0
      %1045 = vadd.xlane.f32.xlu0 %v1044
      %v1046 = vpop.xlane.xlu0 %1045
      %v1047 = vlaneseq
      %v1048 = vshrl.u32 %v1047, 7
      %v1049 = vsub.s32 0, %v1048
      %v1050 = vrot.slane %v1008, %v1049
      %v1051 = vadd.f32 %v1025, %v1050
      %v1052 = vadd.f32 %v1028, %v1050
      %v1053 = vadd.f32 %v1031, %v1050
      %v1054 = vadd.f32 %v1034, %v1050
      %v1055 = vadd.f32 %v1037, %v1050
      %v1056 = vadd.f32 %v1040, %v1050
      %v1057 = vadd.f32 %v1043, %v1050
      %v1058 = vadd.f32 %v1046, %v1050
      %vm1059 = vcmp.gt.f32.partialorder %v1051, 0.0
      %vm1060 = vcmp.gt.f32.partialorder %v1052, 0.0
      %vm1061 = vcmp.gt.f32.partialorder %v1053, 0.0
      %vm1062 = vcmp.gt.f32.partialorder %v1054, 0.0
      %vm1063 = vcmp.gt.f32.partialorder %v1055, 0.0
      %vm1064 = vcmp.gt.f32.partialorder %v1056, 0.0
      %vm1065 = vcmp.gt.f32.partialorder %v1057, 0.0
      %vm1066 = vcmp.gt.f32.partialorder %v1058, 0.0
      %v1067 = vmul.f32 %v1051, 0.2
      %v1068 = vmul.f32 %v1052, 0.2
      %v1069 = vmul.f32 %v1053, 0.2
      %v1070 = vmul.f32 %v1054, 0.2
      %v1071 = vmul.f32 %v1055, 0.2
      %v1072 = vmul.f32 %v1056, 0.2
      %v1073 = vmul.f32 %v1057, 0.2
      %v1074 = vmul.f32 %v1058, 0.2
      %v1075 = vsel %vm1059, %v1051, %v1067
      %v1076 = vsel %vm1060, %v1052, %v1068
      %v1077 = vsel %vm1061, %v1053, %v1069
      %v1078 = vsel %vm1062, %v1054, %v1070
      %v1079 = vsel %vm1063, %v1055, %v1071
      %v1080 = vsel %vm1064, %v1056, %v1072
      %v1081 = vsel %vm1065, %v1057, %v1073
      %v1082 = vsel %vm1066, %v1058, %v1074
      %v1083 = vsel %vm975, %v1075, -1e+30
      %v1084 = vsel %vm976, %v1076, -1e+30
      %v1085 = vsel %vm977, %v1077, -1e+30
      %v1086 = vsel %vm978, %v1078, -1e+30
      %v1087 = vsel %vm979, %v1079, -1e+30
      %v1088 = vsel %vm980, %v1080, -1e+30
      %v1089 = vsel %vm981, %v1081, -1e+30
      %v1090 = vsel %vm982, %v1082, -1e+30
      %1091 = vmax.xlane.f32.xlu0 %v1083
      %v1092 = vpop.xlane.xlu0 %1091
      %1093 = vmax.xlane.f32.xlu0 %v1084
      %v1094 = vpop.xlane.xlu0 %1093
      %1095 = vmax.xlane.f32.xlu0 %v1085
      %v1096 = vpop.xlane.xlu0 %1095
      %1097 = vmax.xlane.f32.xlu0 %v1086
      %v1098 = vpop.xlane.xlu0 %1097
      %1099 = vmax.xlane.f32.xlu0 %v1087
      %v1100 = vpop.xlane.xlu0 %1099
      %1101 = vmax.xlane.f32.xlu0 %v1088
      %v1102 = vpop.xlane.xlu0 %1101
      %1103 = vmax.xlane.f32.xlu0 %v1089
      %v1104 = vpop.xlane.xlu0 %1103
      %1105 = vmax.xlane.f32.xlu0 %v1090
      %v1106 = vpop.xlane.xlu0 %1105
      %v1107 = vsub.f32 %v1083, %v1092
      %v1108 = vsub.f32 %v1084, %v1094
      %v1109 = vsub.f32 %v1085, %v1096
      %v1110 = vsub.f32 %v1086, %v1098
      %v1111 = vsub.f32 %v1087, %v1100
      %v1112 = vsub.f32 %v1088, %v1102
      %v1113 = vsub.f32 %v1089, %v1104
      %v1114 = vsub.f32 %v1090, %v1106
      %v1115 = vmul.f32 %v1107, 1.442695
      %v1116 = vpow.pop %v1115
      %v1117 = vmul.f32 %v1108, 1.442695
      %v1118 = vpow.pop %v1117
      %v1119 = vmul.f32 %v1109, 1.442695
      %v1120 = vpow.pop %v1119
      %v1121 = vmul.f32 %v1110, 1.442695
      %v1122 = vpow.pop %v1121
      %v1123 = vmul.f32 %v1111, 1.442695
      %v1124 = vpow.pop %v1123
      %v1125 = vmul.f32 %v1112, 1.442695
      %v1126 = vpow.pop %v1125
      %v1127 = vmul.f32 %v1113, 1.442695
      %v1128 = vpow.pop %v1127
      %v1129 = vmul.f32 %v1114, 1.442695
      %v1130 = vpow.pop %v1129
      %v1131 = vsel %vm975, %v1116, 0.0
      %v1132 = vsel %vm976, %v1118, 0.0
      %v1133 = vsel %vm977, %v1120, 0.0
      %v1134 = vsel %vm978, %v1122, 0.0
      %v1135 = vsel %vm979, %v1124, 0.0
      %v1136 = vsel %vm980, %v1126, 0.0
      %v1137 = vsel %vm981, %v1128, 0.0
      %v1138 = vsel %vm982, %v1130, 0.0
      %1139 = vadd.xlane.f32.xlu0 %v1131
      %v1140 = vpop.xlane.xlu0 %1139
      %1141 = vadd.xlane.f32.xlu0 %v1132
      %v1142 = vpop.xlane.xlu0 %1141
      %1143 = vadd.xlane.f32.xlu0 %v1133
      %v1144 = vpop.xlane.xlu0 %1143
      %1145 = vadd.xlane.f32.xlu0 %v1134
      %v1146 = vpop.xlane.xlu0 %1145
      %1147 = vadd.xlane.f32.xlu0 %v1135
      %v1148 = vpop.xlane.xlu0 %1147
      %1149 = vadd.xlane.f32.xlu0 %v1136
      %v1150 = vpop.xlane.xlu0 %1149
      %1151 = vadd.xlane.f32.xlu0 %v1137
      %v1152 = vpop.xlane.xlu0 %1151
      %1153 = vadd.xlane.f32.xlu0 %v1138
      %v1154 = vpop.xlane.xlu0 %1153
      %vm1155 = vcmp.gt.f32.partialorder %v1140, 0.0
      %vm1156 = vcmp.gt.f32.partialorder %v1142, 0.0
      %vm1157 = vcmp.gt.f32.partialorder %v1144, 0.0
      %vm1158 = vcmp.gt.f32.partialorder %v1146, 0.0
      %vm1159 = vcmp.gt.f32.partialorder %v1148, 0.0
      %vm1160 = vcmp.gt.f32.partialorder %v1150, 0.0
      %vm1161 = vcmp.gt.f32.partialorder %v1152, 0.0
      %vm1162 = vcmp.gt.f32.partialorder %v1154, 0.0
      %v1163 = vsel %vm1155, %v1140, 1.0
      %v1164 = vsel %vm1156, %v1142, 1.0
      %v1165 = vsel %vm1157, %v1144, 1.0
      %v1166 = vsel %vm1158, %v1146, 1.0
      %v1167 = vsel %vm1159, %v1148, 1.0
      %v1168 = vsel %vm1160, %v1150, 1.0
      %v1169 = vsel %vm1161, %v1152, 1.0
      %v1170 = vsel %vm1162, %v1154, 1.0
      %v1171 = vrcp.pop %v1163
      %v1172 = vmul.f32 %v1131, %v1171
      %v1173 = vrcp.pop %v1164
      %v1174 = vmul.f32 %v1132, %v1173
      %v1175 = vrcp.pop %v1165
      %v1176 = vmul.f32 %v1133, %v1175
      %v1177 = vrcp.pop %v1166
      %v1178 = vmul.f32 %v1134, %v1177
      %v1179 = vrcp.pop %v1167
      %v1180 = vmul.f32 %v1135, %v1179
      %v1181 = vrcp.pop %v1168
      %v1182 = vmul.f32 %v1136, %v1181
      %v1183 = vrcp.pop %v1169
      %v1184 = vmul.f32 %v1137, %v1183
      %v1185 = vrcp.pop %v1170
      %v1186 = vmul.f32 %v1138, %v1185
      %1187 = vmatprep.subr.mxu0 0.0
      %1188 = vmatpush1.msra.mxu0 %v998
      %1189 = vmatprep.subr.mxu0 0.0
      %1190 = vmatpush1.msra.mxu0 %v997
      %1191 = vmatprep.subr.mxu0 0.0
      %1192 = vmatpush1.msra.mxu0 %v996
      %1193 = vmatprep.subr.mxu0 0.0
      %1194 = vmatpush1.msra.mxu0 %v995
      %1195 = vmatprep.subr.mxu0 0.0
      %1196 = vmatpush1.msra.mxu0 %v994
      %1197 = vmatprep.subr.mxu0 0.0
      %1198 = vmatpush1.msra.mxu0 %v993
      %1199 = vmatprep.subr.mxu0 0.0
      %1200 = vmatpush1.msra.mxu0 %v992
      %1201 = vmatprep.subr.mxu0 0.0
      %1202 = vmatpush1.msra.mxu0 %v991
      %1203 = vmatprep.subr.mxu0 0.0
      %1204 = vmatpush1.msra.mxu0 %v990
      %1205 = vmatprep.subr.mxu0 0.0
      %1206 = vmatpush1.msra.mxu0 %v989
      %1207 = vmatprep.subr.mxu0 0.0
      %1208 = vmatpush1.msra.mxu0 %v988
      %1209 = vmatprep.subr.mxu0 0.0
      %1210 = vmatpush1.msra.mxu0 %v987
      %1211 = vmatprep.subr.mxu0 0.0
      %1212 = vmatpush1.msra.mxu0 %v986
      %1213 = vmatprep.subr.mxu0 0.0
      %1214 = vmatpush1.msra.mxu0 %v985
      %1215 = vmatprep.subr.mxu0 0.0
      %1216 = vmatpush1.msra.mxu0 %v984
      %1217 = vmatprep.subr.mxu0 0.0
      %1218 = vmatpush1.msra.mxu0 %v983
      %1219 = vmatprep.subr.mxu0 0.0
      %1220 = vmatpush2.msra.mxu0 0.0
      %1221 = vmatprep.subr.mxu0 0.0
      %1222 = vmatpush2.msra.mxu0 0.0
      %1223 = vmatprep.subr.mxu0 0.0
      %1224 = vmatpush2.msra.mxu0 0.0
      %1225 = vmatprep.subr.mxu0 0.0
      %1226 = vmatpush2.msra.mxu0 0.0
      %1227 = vmatprep.subr.mxu0 0.0
      %1228 = vmatpush2.msra.mxu0 0.0
      %1229 = vmatprep.subr.mxu0 0.0
      %1230 = vmatpush2.msra.mxu0 0.0
      %1231 = vmatprep.subr.mxu0 0.0
      %1232 = vmatpush2.msra.mxu0 0.0
      %1233 = vmatprep.subr.mxu0 0.0
      %1234 = vmatpush2.msra.mxu0 0.0
      %1235 = vmatprep.subr.mxu0 0.0
      %1236 = vmatpush2.msra.mxu0 0.0
      %1237 = vmatprep.subr.mxu0 0.0
      %1238 = vmatpush2.msra.mxu0 0.0
      %1239 = vmatprep.subr.mxu0 0.0
      %1240 = vmatpush2.msra.mxu0 0.0
      %1241 = vmatprep.subr.mxu0 0.0
      %1242 = vmatpush2.msra.mxu0 0.0
      %1243 = vmatprep.subr.mxu0 0.0
      %1244 = vmatpush2.msra.mxu0 0.0
      %1245 = vmatprep.subr.mxu0 0.0
      %1246 = vmatpush2.msra.mxu0 0.0
      %1247 = vmatprep.subr.mxu0 0.0
      %1248 = vmatpush2.msra.mxu0 0.0
      %1249 = vmatprep.subr.mxu0 0.0
      %1250 = vmatpush2.msra.mxu0 0.0
      %1251 = vmatprep.mubr.f32.mxu0 0.0
      %1252 = vmatmul.mubr.f32.gmra.mxu0 %v1172
      %v1253 = vpop.f32.mrf.mxu0
      %v1254 = vadd.f32 0.0, %v1253
      %v1255 = vpop.f32.mrf.mxu0
      %1256 = vmatprep.mubr.f32.mxu0 0.0
      %1257 = vmatmul.mubr.f32.gmra.mxu0 %v1174
      %v1258 = vpop.f32.mrf.mxu0
      %v1259 = vadd.f32 0.0, %v1258
      %v1260 = vpop.f32.mrf.mxu0
      %1261 = vmatprep.mubr.f32.mxu0 0.0
      %1262 = vmatmul.mubr.f32.gmra.mxu0 %v1176
      %v1263 = vpop.f32.mrf.mxu0
      %v1264 = vadd.f32 0.0, %v1263
      %v1265 = vpop.f32.mrf.mxu0
      %1266 = vmatprep.mubr.f32.mxu0 0.0
      %1267 = vmatmul.mubr.f32.gmra.mxu0 %v1178
      %v1268 = vpop.f32.mrf.mxu0
      %v1269 = vadd.f32 0.0, %v1268
      %v1270 = vpop.f32.mrf.mxu0
      %1271 = vmatprep.mubr.f32.mxu0 0.0
      %1272 = vmatmul.mubr.f32.gmra.mxu0 %v1180
      %v1273 = vpop.f32.mrf.mxu0
      %v1274 = vadd.f32 0.0, %v1273
      %v1275 = vpop.f32.mrf.mxu0
      %1276 = vmatprep.mubr.f32.mxu0 0.0
      %1277 = vmatmul.mubr.f32.gmra.mxu0 %v1182
      %v1278 = vpop.f32.mrf.mxu0
      %v1279 = vadd.f32 0.0, %v1278
      %v1280 = vpop.f32.mrf.mxu0
      %1281 = vmatprep.mubr.f32.mxu0 0.0
      %1282 = vmatmul.mubr.f32.gmra.mxu0 %v1184
      %v1283 = vpop.f32.mrf.mxu0
      %v1284 = vadd.f32 0.0, %v1283
      %v1285 = vpop.f32.mrf.mxu0
      %1286 = vmatprep.mubr.f32.mxu0 0.0
      %1287 = vmatmul.mubr.f32.gmra.mxu0 %v1186
      %v1288 = vpop.f32.mrf.mxu0
      %v1289 = vadd.f32 0.0, %v1288
      %v1290 = vpop.f32.mrf.mxu0
      %1291 = vdwg.mxu0
      %v1292 = vlaneseq
      %v1293 = vshrl.u32 %v1292, 7
      %v1294 = vsub.s32 1, %v1293
      %v1295 = vrot.slane %v1009, %v1294
      %1297 = vrot.lane.b32.xlu0 %v1295, 8
      %v1298 = vpop.permute.xlu0 %1297
      %v1300 = vmul.f32 %v1000, %v1298
      %v1301 = vmul.f32 %v1001, %v1298
      %v1302 = vmul.f32 %v1002, %v1298
      %v1303 = vmul.f32 %v1003, %v1298
      %v1304 = vmul.f32 %v1004, %v1298
      %v1305 = vmul.f32 %v1005, %v1298
      %v1306 = vmul.f32 %v1006, %v1298
      %v1307 = vmul.f32 %v1007, %v1298
      %1316 = vrot.lane.b32.xlu0 %v1300, 120
      %v1317 = vpop.permute.xlu0 %1316
      %1318 = vrot.lane.b32.xlu0 %v1301, 120
      %v1319 = vpop.permute.xlu0 %1318
      %1320 = vrot.lane.b32.xlu0 %v1302, 120
      %v1321 = vpop.permute.xlu0 %1320
      %1322 = vrot.lane.b32.xlu0 %v1303, 120
      %v1323 = vpop.permute.xlu0 %1322
      %1324 = vrot.lane.b32.xlu0 %v1304, 120
      %v1325 = vpop.permute.xlu0 %1324
      %1326 = vrot.lane.b32.xlu0 %v1305, 120
      %v1327 = vpop.permute.xlu0 %1326
      %1328 = vrot.lane.b32.xlu0 %v1306, 120
      %v1329 = vpop.permute.xlu0 %1328
      %1330 = vrot.lane.b32.xlu0 %v1307, 120
      %v1331 = vpop.permute.xlu0 %1330
      %v1340 = vsel %vm1022, %v1317, 0.0
      %1341 = vadd.xlane.f32.xlu0 %v1340
      %v1342 = vpop.xlane.xlu0 %1341
      %v1343 = vsel %vm1022, %v1319, 0.0
      %1344 = vadd.xlane.f32.xlu0 %v1343
      %v1345 = vpop.xlane.xlu0 %1344
      %v1346 = vsel %vm1022, %v1321, 0.0
      %1347 = vadd.xlane.f32.xlu0 %v1346
      %v1348 = vpop.xlane.xlu0 %1347
      %v1349 = vsel %vm1022, %v1323, 0.0
      %1350 = vadd.xlane.f32.xlu0 %v1349
      %v1351 = vpop.xlane.xlu0 %1350
      %v1352 = vsel %vm1022, %v1325, 0.0
      %1353 = vadd.xlane.f32.xlu0 %v1352
      %v1354 = vpop.xlane.xlu0 %1353
      %v1355 = vsel %vm1022, %v1327, 0.0
      %1356 = vadd.xlane.f32.xlu0 %v1355
      %v1357 = vpop.xlane.xlu0 %1356
      %v1358 = vsel %vm1022, %v1329, 0.0
      %1359 = vadd.xlane.f32.xlu0 %v1358
      %v1360 = vpop.xlane.xlu0 %1359
      %v1361 = vsel %vm1022, %v1331, 0.0
      %1362 = vadd.xlane.f32.xlu0 %v1361
      %v1363 = vpop.xlane.xlu0 %1362
      %v1364 = vlaneseq
      %v1365 = vshrl.u32 %v1364, 7
      %v1366 = vsub.s32 1, %v1365
      %v1367 = vrot.slane %v1008, %v1366
      %v1368 = vadd.f32 %v1342, %v1367
      %v1369 = vadd.f32 %v1345, %v1367
      %v1370 = vadd.f32 %v1348, %v1367
      %v1371 = vadd.f32 %v1351, %v1367
      %v1372 = vadd.f32 %v1354, %v1367
      %v1373 = vadd.f32 %v1357, %v1367
      %v1374 = vadd.f32 %v1360, %v1367
      %v1375 = vadd.f32 %v1363, %v1367
      %vm1376 = vcmp.gt.f32.partialorder %v1368, 0.0
      %vm1377 = vcmp.gt.f32.partialorder %v1369, 0.0
      %vm1378 = vcmp.gt.f32.partialorder %v1370, 0.0
      %vm1379 = vcmp.gt.f32.partialorder %v1371, 0.0
      %vm1380 = vcmp.gt.f32.partialorder %v1372, 0.0
      %vm1381 = vcmp.gt.f32.partialorder %v1373, 0.0
      %vm1382 = vcmp.gt.f32.partialorder %v1374, 0.0
      %vm1383 = vcmp.gt.f32.partialorder %v1375, 0.0
      %v1384 = vmul.f32 %v1368, 0.2
      %v1385 = vmul.f32 %v1369, 0.2
      %v1386 = vmul.f32 %v1370, 0.2
      %v1387 = vmul.f32 %v1371, 0.2
      %v1388 = vmul.f32 %v1372, 0.2
      %v1389 = vmul.f32 %v1373, 0.2
      %v1390 = vmul.f32 %v1374, 0.2
      %v1391 = vmul.f32 %v1375, 0.2
      %v1392 = vsel %vm1376, %v1368, %v1384
      %v1393 = vsel %vm1377, %v1369, %v1385
      %v1394 = vsel %vm1378, %v1370, %v1386
      %v1395 = vsel %vm1379, %v1371, %v1387
      %v1396 = vsel %vm1380, %v1372, %v1388
      %v1397 = vsel %vm1381, %v1373, %v1389
      %v1398 = vsel %vm1382, %v1374, %v1390
      %v1399 = vsel %vm1383, %v1375, %v1391
      %v1400 = vsel %vm975, %v1392, -1e+30
      %v1401 = vsel %vm976, %v1393, -1e+30
      %v1402 = vsel %vm977, %v1394, -1e+30
      %v1403 = vsel %vm978, %v1395, -1e+30
      %v1404 = vsel %vm979, %v1396, -1e+30
      %v1405 = vsel %vm980, %v1397, -1e+30
      %v1406 = vsel %vm981, %v1398, -1e+30
      %v1407 = vsel %vm982, %v1399, -1e+30
      %1408 = vmax.xlane.f32.xlu0 %v1400
      %v1409 = vpop.xlane.xlu0 %1408
      %1410 = vmax.xlane.f32.xlu0 %v1401
      %v1411 = vpop.xlane.xlu0 %1410
      %1412 = vmax.xlane.f32.xlu0 %v1402
      %v1413 = vpop.xlane.xlu0 %1412
      %1414 = vmax.xlane.f32.xlu0 %v1403
      %v1415 = vpop.xlane.xlu0 %1414
      %1416 = vmax.xlane.f32.xlu0 %v1404
      %v1417 = vpop.xlane.xlu0 %1416
      %1418 = vmax.xlane.f32.xlu0 %v1405
      %v1419 = vpop.xlane.xlu0 %1418
      %1420 = vmax.xlane.f32.xlu0 %v1406
      %v1421 = vpop.xlane.xlu0 %1420
      %1422 = vmax.xlane.f32.xlu0 %v1407
      %v1423 = vpop.xlane.xlu0 %1422
      %v1424 = vsub.f32 %v1400, %v1409
      %v1425 = vsub.f32 %v1401, %v1411
      %v1426 = vsub.f32 %v1402, %v1413
      %v1427 = vsub.f32 %v1403, %v1415
      %v1428 = vsub.f32 %v1404, %v1417
      %v1429 = vsub.f32 %v1405, %v1419
      %v1430 = vsub.f32 %v1406, %v1421
      %v1431 = vsub.f32 %v1407, %v1423
      %v1432 = vmul.f32 %v1424, 1.442695
      %v1433 = vpow.pop %v1432
      %v1434 = vmul.f32 %v1425, 1.442695
      %v1435 = vpow.pop %v1434
      %v1436 = vmul.f32 %v1426, 1.442695
      %v1437 = vpow.pop %v1436
      %v1438 = vmul.f32 %v1427, 1.442695
      %v1439 = vpow.pop %v1438
      %v1440 = vmul.f32 %v1428, 1.442695
      %v1441 = vpow.pop %v1440
      %v1442 = vmul.f32 %v1429, 1.442695
      %v1443 = vpow.pop %v1442
      %v1444 = vmul.f32 %v1430, 1.442695
      %v1445 = vpow.pop %v1444
      %v1446 = vmul.f32 %v1431, 1.442695
      %v1447 = vpow.pop %v1446
      %v1448 = vsel %vm975, %v1433, 0.0
      %v1449 = vsel %vm976, %v1435, 0.0
      %v1450 = vsel %vm977, %v1437, 0.0
      %v1451 = vsel %vm978, %v1439, 0.0
      %v1452 = vsel %vm979, %v1441, 0.0
      %v1453 = vsel %vm980, %v1443, 0.0
      %v1454 = vsel %vm981, %v1445, 0.0
      %v1455 = vsel %vm982, %v1447, 0.0
      %1456 = vadd.xlane.f32.xlu0 %v1448
      %v1457 = vpop.xlane.xlu0 %1456
      %1458 = vadd.xlane.f32.xlu0 %v1449
      %v1459 = vpop.xlane.xlu0 %1458
      %1460 = vadd.xlane.f32.xlu0 %v1450
      %v1461 = vpop.xlane.xlu0 %1460
      %1462 = vadd.xlane.f32.xlu0 %v1451
      %v1463 = vpop.xlane.xlu0 %1462
      %1464 = vadd.xlane.f32.xlu0 %v1452
      %v1465 = vpop.xlane.xlu0 %1464
      %1466 = vadd.xlane.f32.xlu0 %v1453
      %v1467 = vpop.xlane.xlu0 %1466
      %1468 = vadd.xlane.f32.xlu0 %v1454
      %v1469 = vpop.xlane.xlu0 %1468
      %1470 = vadd.xlane.f32.xlu0 %v1455
      %v1471 = vpop.xlane.xlu0 %1470
      %vm1472 = vcmp.gt.f32.partialorder %v1457, 0.0
      %vm1473 = vcmp.gt.f32.partialorder %v1459, 0.0
      %vm1474 = vcmp.gt.f32.partialorder %v1461, 0.0
      %vm1475 = vcmp.gt.f32.partialorder %v1463, 0.0
      %vm1476 = vcmp.gt.f32.partialorder %v1465, 0.0
      %vm1477 = vcmp.gt.f32.partialorder %v1467, 0.0
      %vm1478 = vcmp.gt.f32.partialorder %v1469, 0.0
      %vm1479 = vcmp.gt.f32.partialorder %v1471, 0.0
      %v1480 = vsel %vm1472, %v1457, 1.0
      %v1481 = vsel %vm1473, %v1459, 1.0
      %v1482 = vsel %vm1474, %v1461, 1.0
      %v1483 = vsel %vm1475, %v1463, 1.0
      %v1484 = vsel %vm1476, %v1465, 1.0
      %v1485 = vsel %vm1477, %v1467, 1.0
      %v1486 = vsel %vm1478, %v1469, 1.0
      %v1487 = vsel %vm1479, %v1471, 1.0
      %v1488 = vrcp.pop %v1480
      %v1489 = vmul.f32 %v1448, %v1488
      %v1490 = vrcp.pop %v1481
      %v1491 = vmul.f32 %v1449, %v1490
      %v1492 = vrcp.pop %v1482
      %v1493 = vmul.f32 %v1450, %v1492
      %v1494 = vrcp.pop %v1483
      %v1495 = vmul.f32 %v1451, %v1494
      %v1496 = vrcp.pop %v1484
      %v1497 = vmul.f32 %v1452, %v1496
      %v1498 = vrcp.pop %v1485
      %v1499 = vmul.f32 %v1453, %v1498
      %v1500 = vrcp.pop %v1486
      %v1501 = vmul.f32 %v1454, %v1500
      %v1502 = vrcp.pop %v1487
      %v1503 = vmul.f32 %v1455, %v1502
      %1520 = vrot.lane.b32.xlu0 %v983, 120
      %v1521 = vpop.permute.xlu0 %1520
      %1522 = vrot.lane.b32.xlu0 %v984, 120
      %v1523 = vpop.permute.xlu0 %1522
      %1524 = vrot.lane.b32.xlu0 %v985, 120
      %v1525 = vpop.permute.xlu0 %1524
      %1526 = vrot.lane.b32.xlu0 %v986, 120
      %v1527 = vpop.permute.xlu0 %1526
      %1528 = vrot.lane.b32.xlu0 %v987, 120
      %v1529 = vpop.permute.xlu0 %1528
      %1530 = vrot.lane.b32.xlu0 %v988, 120
      %v1531 = vpop.permute.xlu0 %1530
      %1532 = vrot.lane.b32.xlu0 %v989, 120
      %v1533 = vpop.permute.xlu0 %1532
      %1534 = vrot.lane.b32.xlu0 %v990, 120
      %v1535 = vpop.permute.xlu0 %1534
      %1536 = vrot.lane.b32.xlu0 %v991, 120
      %v1537 = vpop.permute.xlu0 %1536
      %1538 = vrot.lane.b32.xlu0 %v992, 120
      %v1539 = vpop.permute.xlu0 %1538
      %1540 = vrot.lane.b32.xlu0 %v993, 120
      %v1541 = vpop.permute.xlu0 %1540
      %1542 = vrot.lane.b32.xlu0 %v994, 120
      %v1543 = vpop.permute.xlu0 %1542
      %1544 = vrot.lane.b32.xlu0 %v995, 120
      %v1545 = vpop.permute.xlu0 %1544
      %1546 = vrot.lane.b32.xlu0 %v996, 120
      %v1547 = vpop.permute.xlu0 %1546
      %1548 = vrot.lane.b32.xlu0 %v997, 120
      %v1549 = vpop.permute.xlu0 %1548
      %1550 = vrot.lane.b32.xlu0 %v998, 120
      %v1551 = vpop.permute.xlu0 %1550
      %1568 = vmatprep.subr.mxu0 0.0
      %1569 = vmatpush1.msra.mxu0 %v1551
      %1570 = vmatprep.subr.mxu0 0.0
      %1571 = vmatpush1.msra.mxu0 %v1549
      %1572 = vmatprep.subr.mxu0 0.0
      %1573 = vmatpush1.msra.mxu0 %v1547
      %1574 = vmatprep.subr.mxu0 0.0
      %1575 = vmatpush1.msra.mxu0 %v1545
      %1576 = vmatprep.subr.mxu0 0.0
      %1577 = vmatpush1.msra.mxu0 %v1543
      %1578 = vmatprep.subr.mxu0 0.0
      %1579 = vmatpush1.msra.mxu0 %v1541
      %1580 = vmatprep.subr.mxu0 0.0
      %1581 = vmatpush1.msra.mxu0 %v1539
      %1582 = vmatprep.subr.mxu0 0.0
      %1583 = vmatpush1.msra.mxu0 %v1537
      %1584 = vmatprep.subr.mxu0 0.0
      %1585 = vmatpush1.msra.mxu0 %v1535
      %1586 = vmatprep.subr.mxu0 0.0
      %1587 = vmatpush1.msra.mxu0 %v1533
      %1588 = vmatprep.subr.mxu0 0.0
      %1589 = vmatpush1.msra.mxu0 %v1531
      %1590 = vmatprep.subr.mxu0 0.0
      %1591 = vmatpush1.msra.mxu0 %v1529
      %1592 = vmatprep.subr.mxu0 0.0
      %1593 = vmatpush1.msra.mxu0 %v1527
      %1594 = vmatprep.subr.mxu0 0.0
      %1595 = vmatpush1.msra.mxu0 %v1525
      %1596 = vmatprep.subr.mxu0 0.0
      %1597 = vmatpush1.msra.mxu0 %v1523
      %1598 = vmatprep.subr.mxu0 0.0
      %1599 = vmatpush1.msra.mxu0 %v1521
      %1600 = vmatprep.subr.mxu0 0.0
      %1601 = vmatpush2.msra.mxu0 0.0
      %1602 = vmatprep.subr.mxu0 0.0
      %1603 = vmatpush2.msra.mxu0 0.0
      %1604 = vmatprep.subr.mxu0 0.0
      %1605 = vmatpush2.msra.mxu0 0.0
      %1606 = vmatprep.subr.mxu0 0.0
      %1607 = vmatpush2.msra.mxu0 0.0
      %1608 = vmatprep.subr.mxu0 0.0
      %1609 = vmatpush2.msra.mxu0 0.0
      %1610 = vmatprep.subr.mxu0 0.0
      %1611 = vmatpush2.msra.mxu0 0.0
      %1612 = vmatprep.subr.mxu0 0.0
      %1613 = vmatpush2.msra.mxu0 0.0
      %1614 = vmatprep.subr.mxu0 0.0
      %1615 = vmatpush2.msra.mxu0 0.0
      %1616 = vmatprep.subr.mxu0 0.0
      %1617 = vmatpush2.msra.mxu0 0.0
      %1618 = vmatprep.subr.mxu0 0.0
      %1619 = vmatpush2.msra.mxu0 0.0
      %1620 = vmatprep.subr.mxu0 0.0
      %1621 = vmatpush2.msra.mxu0 0.0
      %1622 = vmatprep.subr.mxu0 0.0
      %1623 = vmatpush2.msra.mxu0 0.0
      %1624 = vmatprep.subr.mxu0 0.0
      %1625 = vmatpush2.msra.mxu0 0.0
      %1626 = vmatprep.subr.mxu0 0.0
      %1627 = vmatpush2.msra.mxu0 0.0
      %1628 = vmatprep.subr.mxu0 0.0
      %1629 = vmatpush2.msra.mxu0 0.0
      %1630 = vmatprep.subr.mxu0 0.0
      %1631 = vmatpush2.msra.mxu0 0.0
      %1632 = vmatprep.mubr.f32.mxu0 0.0
      %1633 = vmatmul.mubr.f32.gmra.mxu0 %v1489
      %v1634 = vpop.f32.mrf.mxu0
      %v1635 = vadd.f32 0.0, %v1634
      %v1636 = vpop.f32.mrf.mxu0
      %1637 = vmatprep.mubr.f32.mxu0 0.0
      %1638 = vmatmul.mubr.f32.gmra.mxu0 %v1491
      %v1639 = vpop.f32.mrf.mxu0
      %v1640 = vadd.f32 0.0, %v1639
      %v1641 = vpop.f32.mrf.mxu0
      %1642 = vmatprep.mubr.f32.mxu0 0.0
      %1643 = vmatmul.mubr.f32.gmra.mxu0 %v1493
      %v1644 = vpop.f32.mrf.mxu0
      %v1645 = vadd.f32 0.0, %v1644
      %v1646 = vpop.f32.mrf.mxu0
      %1647 = vmatprep.mubr.f32.mxu0 0.0
      %1648 = vmatmul.mubr.f32.gmra.mxu0 %v1495
      %v1649 = vpop.f32.mrf.mxu0
      %v1650 = vadd.f32 0.0, %v1649
      %v1651 = vpop.f32.mrf.mxu0
      %1652 = vmatprep.mubr.f32.mxu0 0.0
      %1653 = vmatmul.mubr.f32.gmra.mxu0 %v1497
      %v1654 = vpop.f32.mrf.mxu0
      %v1655 = vadd.f32 0.0, %v1654
      %v1656 = vpop.f32.mrf.mxu0
      %1657 = vmatprep.mubr.f32.mxu0 0.0
      %1658 = vmatmul.mubr.f32.gmra.mxu0 %v1499
      %v1659 = vpop.f32.mrf.mxu0
      %v1660 = vadd.f32 0.0, %v1659
      %v1661 = vpop.f32.mrf.mxu0
      %1662 = vmatprep.mubr.f32.mxu0 0.0
      %1663 = vmatmul.mubr.f32.gmra.mxu0 %v1501
      %v1664 = vpop.f32.mrf.mxu0
      %v1665 = vadd.f32 0.0, %v1664
      %v1666 = vpop.f32.mrf.mxu0
      %1667 = vmatprep.mubr.f32.mxu0 0.0
      %1668 = vmatmul.mubr.f32.gmra.mxu0 %v1503
      %v1669 = vpop.f32.mrf.mxu0
      %v1670 = vadd.f32 0.0, %v1669
      %v1671 = vpop.f32.mrf.mxu0
      %1672 = vdwg.mxu0
      %1681 = vrot.lane.b32.xlu0 %v1635, 8
      %v1682 = vpop.permute.xlu0 %1681
      %1683 = vrot.lane.b32.xlu0 %v1640, 8
      %v1684 = vpop.permute.xlu0 %1683
      %1685 = vrot.lane.b32.xlu0 %v1645, 8
      %v1686 = vpop.permute.xlu0 %1685
      %1687 = vrot.lane.b32.xlu0 %v1650, 8
      %v1688 = vpop.permute.xlu0 %1687
      %1689 = vrot.lane.b32.xlu0 %v1655, 8
      %v1690 = vpop.permute.xlu0 %1689
      %1691 = vrot.lane.b32.xlu0 %v1660, 8
      %v1692 = vpop.permute.xlu0 %1691
      %1693 = vrot.lane.b32.xlu0 %v1665, 8
      %v1694 = vpop.permute.xlu0 %1693
      %1695 = vrot.lane.b32.xlu0 %v1670, 8
      %v1696 = vpop.permute.xlu0 %1695
      %v1705 = vsel %vm1022, %v1254, %v1682
      %v1706 = vsel %vm1022, %v1259, %v1684
      %v1707 = vsel %vm1022, %v1264, %v1686
      %v1708 = vsel %vm1022, %v1269, %v1688
      %v1709 = vsel %vm1022, %v1274, %v1690
      %v1710 = vsel %vm1022, %v1279, %v1692
      %v1711 = vsel %vm1022, %v1284, %v1694
      %v1712 = vsel %vm1022, %v1289, %v1696
      %v1713 = vld [vmem:[%s462] sm:$0x1]
      %v1715 = vlaneseq
      %v1716 = vshrl.u32 %v1715, 7
      %v1717 = vsub.s32 0, %v1716
      %v1718 = vrot.slane %v1713, %v1717
      %v1720 = vadd.f32 %v1705, %v1718
      %v1721 = vadd.f32 %v1706, %v1718
      %v1722 = vadd.f32 %v1707, %v1718
      %v1723 = vadd.f32 %v1708, %v1718
      %v1724 = vadd.f32 %v1709, %v1718
      %v1725 = vadd.f32 %v1710, %v1718
      %v1726 = vadd.f32 %v1711, %v1718
      %v1727 = vadd.f32 %v1712, %v1718
      %vm1728 = vcmp.gt.f32.partialorder %v1720, 0.0
      %vm1729 = vcmp.gt.f32.partialorder %v1721, 0.0
      %vm1730 = vcmp.gt.f32.partialorder %v1722, 0.0
      %vm1731 = vcmp.gt.f32.partialorder %v1723, 0.0
      %vm1732 = vcmp.gt.f32.partialorder %v1724, 0.0
      %vm1733 = vcmp.gt.f32.partialorder %v1725, 0.0
      %vm1734 = vcmp.gt.f32.partialorder %v1726, 0.0
      %vm1735 = vcmp.gt.f32.partialorder %v1727, 0.0
      %v1736 = vmul.f32 %v1720, 1.442695
      %v1737 = vpow.pop %v1736
      %v1738 = vmul.f32 %v1721, 1.442695
      %v1739 = vpow.pop %v1738
      %v1740 = vmul.f32 %v1722, 1.442695
      %v1741 = vpow.pop %v1740
      %v1742 = vmul.f32 %v1723, 1.442695
      %v1743 = vpow.pop %v1742
      %v1744 = vmul.f32 %v1724, 1.442695
      %v1745 = vpow.pop %v1744
      %v1746 = vmul.f32 %v1725, 1.442695
      %v1747 = vpow.pop %v1746
      %v1748 = vmul.f32 %v1726, 1.442695
      %v1749 = vpow.pop %v1748
      %v1750 = vmul.f32 %v1727, 1.442695
      %v1751 = vpow.pop %v1750
      %v1752 = vsub.f32 %v1737, 1.0
      %v1753 = vsub.f32 %v1739, 1.0
      %v1754 = vsub.f32 %v1741, 1.0
      %v1755 = vsub.f32 %v1743, 1.0
      %v1756 = vsub.f32 %v1745, 1.0
      %v1757 = vsub.f32 %v1747, 1.0
      %v1758 = vsub.f32 %v1749, 1.0
      %v1759 = vsub.f32 %v1751, 1.0
      %v1760 = vsel %vm1728, %v1720, %v1752
      %v1761 = vsel %vm1729, %v1721, %v1753
      %v1762 = vsel %vm1730, %v1722, %v1754
      %v1763 = vsel %vm1731, %v1723, %v1755
      %v1764 = vsel %vm1732, %v1724, %v1756
      %v1765 = vsel %vm1733, %v1725, %v1757
      %v1766 = vsel %vm1734, %v1726, %v1758
      %v1767 = vsel %vm1735, %v1727, %v1759
      %vm1768 = vcmask 130048
      %1769 = vst.msk [vmem:[%s471] sm:$0xff] %vm1768, %v1760
      %1770 = vst.msk [vmem:[%s471 + $0x8] sm:$0xff] %vm1768, %v1761
      %1771 = vst.msk [vmem:[%s471 + $0x10] sm:$0xff] %vm1768, %v1762
      %1772 = vst.msk [vmem:[%s471 + $0x18] sm:$0xff] %vm1768, %v1763
      %1773 = vst.msk [vmem:[%s471 + $0x20] sm:$0xff] %vm1768, %v1764
      %1774 = vst.msk [vmem:[%s471 + $0x28] sm:$0xff] %vm1768, %v1765
      %1775 = vst.msk [vmem:[%s471 + $0x30] sm:$0xff] %vm1768, %v1766
      %1776 = vst.msk [vmem:[%s471 + $0x38] sm:$0xff] %vm1768, %v1767
      %v1777 = vld [vmem:[%s6] sm:$0xff]
      %v1778 = vld [vmem:[%s6 + $0x8] sm:$0xff]
      %v1779 = vld [vmem:[%s7] sm:$0x1]
      %v1781 = vlaneseq
      %v1782 = vshrl.u32 %v1781, 7
      %v1783 = vsub.s32 0, %v1782
      %v1784 = vrot.slane %v1779, %v1783
      %v1787 = vsel %vm1768, %v1760, 0
      %v1790 = vsel %vm1768, %v1761, 0
      %v1793 = vsel %vm1768, %v1762, 0
      %v1796 = vsel %vm1768, %v1763, 0
      %v1799 = vsel %vm1768, %v1764, 0
      %v1802 = vsel %vm1768, %v1765, 0
      %v1805 = vsel %vm1768, %v1766, 0
      %v1808 = vsel %vm1768, %v1767, 0
      %1810 = vmatprep.subr.mxu0 0.0
      %1811 = vmatpush1.msra.mxu0 0.0
      %1812 = vmatprep.subr.mxu0 0.0
      %1813 = vmatpush1.msra.mxu0 0.0
      %1814 = vmatprep.subr.mxu0 0.0
      %1815 = vmatpush1.msra.mxu0 0.0
      %1816 = vmatprep.subr.mxu0 0.0
      %1817 = vmatpush1.msra.mxu0 0.0
      %1818 = vmatprep.subr.mxu0 0.0
      %1819 = vmatpush1.msra.mxu0 0.0
      %1820 = vmatprep.subr.mxu0 0.0
      %1821 = vmatpush1.msra.mxu0 0.0
      %1822 = vmatprep.subr.mxu0 0.0
      %1823 = vmatpush1.msra.mxu0 0.0
      %1824 = vmatprep.subr.mxu0 0.0
      %1825 = vmatpush1.msra.mxu0 0.0
      %1826 = vmatprep.subr.mxu0 0.0
      %1827 = vmatpush1.msra.mxu0 0.0
      %1828 = vmatprep.subr.mxu0 0.0
      %1829 = vmatpush1.msra.mxu0 0.0
      %1830 = vmatprep.subr.mxu0 0.0
      %1831 = vmatpush1.msra.mxu0 0.0
      %1832 = vmatprep.subr.mxu0 0.0
      %1833 = vmatpush1.msra.mxu0 0.0
      %1834 = vmatprep.subr.mxu0 0.0
      %1835 = vmatpush1.msra.mxu0 0.0
      %1836 = vmatprep.subr.mxu0 0.0
      %1837 = vmatpush1.msra.mxu0 0.0
      %1838 = vmatprep.subr.mxu0 0.0
      %1839 = vmatpush1.msra.mxu0 %v1778
      %1840 = vmatprep.subr.mxu0 0.0
      %1841 = vmatpush1.msra.mxu0 %v1777
      %1842 = vmatprep.subr.mxu0 0.0
      %1843 = vmatpush2.msra.mxu0 0.0
      %1844 = vmatprep.subr.mxu0 0.0
      %1845 = vmatpush2.msra.mxu0 0.0
      %1846 = vmatprep.subr.mxu0 0.0
      %1847 = vmatpush2.msra.mxu0 0.0
      %1848 = vmatprep.subr.mxu0 0.0
      %1849 = vmatpush2.msra.mxu0 0.0
      %1850 = vmatprep.subr.mxu0 0.0
      %1851 = vmatpush2.msra.mxu0 0.0
      %1852 = vmatprep.subr.mxu0 0.0
      %1853 = vmatpush2.msra.mxu0 0.0
      %1854 = vmatprep.subr.mxu0 0.0
      %1855 = vmatpush2.msra.mxu0 0.0
      %1856 = vmatprep.subr.mxu0 0.0
      %1857 = vmatpush2.msra.mxu0 0.0
      %1858 = vmatprep.subr.mxu0 0.0
      %1859 = vmatpush2.msra.mxu0 0.0
      %1860 = vmatprep.subr.mxu0 0.0
      %1861 = vmatpush2.msra.mxu0 0.0
      %1862 = vmatprep.subr.mxu0 0.0
      %1863 = vmatpush2.msra.mxu0 0.0
      %1864 = vmatprep.subr.mxu0 0.0
      %1865 = vmatpush2.msra.mxu0 0.0
      %1866 = vmatprep.subr.mxu0 0.0
      %1867 = vmatpush2.msra.mxu0 0.0
      %1868 = vmatprep.subr.mxu0 0.0
      %1869 = vmatpush2.msra.mxu0 0.0
      %1870 = vmatprep.subr.mxu0 0.0
      %1871 = vmatpush2.msra.mxu0 0.0
      %1872 = vmatprep.subr.mxu0 0.0
      %1873 = vmatpush2.msra.mxu0 0.0
      %1874 = vmatprep.mubr.f32.mxu0 0.0
      %1875 = vmatmul.mubr.f32.gmra.mxu0 %v1787
      %v1876 = vpop.f32.mrf.mxu0
      %v1877 = vadd.f32 %v1784, %v1876
      %v1878 = vpop.f32.mrf.mxu0
      %1879 = vmatprep.mubr.f32.mxu0 0.0
      %1880 = vmatmul.mubr.f32.gmra.mxu0 %v1790
      %v1881 = vpop.f32.mrf.mxu0
      %v1882 = vadd.f32 %v1784, %v1881
      %v1883 = vpop.f32.mrf.mxu0
      %1884 = vmatprep.mubr.f32.mxu0 0.0
      %1885 = vmatmul.mubr.f32.gmra.mxu0 %v1793
      %v1886 = vpop.f32.mrf.mxu0
      %v1887 = vadd.f32 %v1784, %v1886
      %v1888 = vpop.f32.mrf.mxu0
      %1889 = vmatprep.mubr.f32.mxu0 0.0
      %1890 = vmatmul.mubr.f32.gmra.mxu0 %v1796
      %v1891 = vpop.f32.mrf.mxu0
      %v1892 = vadd.f32 %v1784, %v1891
      %v1893 = vpop.f32.mrf.mxu0
      %1894 = vmatprep.mubr.f32.mxu0 0.0
      %1895 = vmatmul.mubr.f32.gmra.mxu0 %v1799
      %v1896 = vpop.f32.mrf.mxu0
      %v1897 = vadd.f32 %v1784, %v1896
      %v1898 = vpop.f32.mrf.mxu0
      %1899 = vmatprep.mubr.f32.mxu0 0.0
      %1900 = vmatmul.mubr.f32.gmra.mxu0 %v1802
      %v1901 = vpop.f32.mrf.mxu0
      %v1902 = vadd.f32 %v1784, %v1901
      %v1903 = vpop.f32.mrf.mxu0
      %1904 = vmatprep.mubr.f32.mxu0 0.0
      %1905 = vmatmul.mubr.f32.gmra.mxu0 %v1805
      %v1906 = vpop.f32.mrf.mxu0
      %v1907 = vadd.f32 %v1784, %v1906
      %v1908 = vpop.f32.mrf.mxu0
      %1909 = vmatprep.mubr.f32.mxu0 0.0
      %1910 = vmatmul.mubr.f32.gmra.mxu0 %v1808
      %v1911 = vpop.f32.mrf.mxu0
      %v1912 = vadd.f32 %v1784, %v1911
      %v1913 = vpop.f32.mrf.mxu0
      %1914 = vdwg.mxu0
      %v1915 = vtanh.pop %v1877
      %v1916 = vtanh.pop %v1882
      %v1917 = vtanh.pop %v1887
      %v1918 = vtanh.pop %v1892
      %v1919 = vtanh.pop %v1897
      %v1920 = vtanh.pop %v1902
      %v1921 = vtanh.pop %v1907
      %v1922 = vtanh.pop %v1912
      %v1923 = vld [vmem:[%s8] sm:$0x1]
      %v1925 = vlaneseq
      %v1926 = vshrl.u32 %v1925, 7
      %v1927 = vsub.s32 0, %v1926
      %v1928 = vrot.slane %v1923, %v1927
      %v1930 = vmul.f32 %v1915, %v1928
      %v1931 = vmul.f32 %v1916, %v1928
      %v1932 = vmul.f32 %v1917, %v1928
      %v1933 = vmul.f32 %v1918, %v1928
      %v1934 = vmul.f32 %v1919, %v1928
      %v1935 = vmul.f32 %v1920, %v1928
      %v1936 = vmul.f32 %v1921, %v1928
      %v1937 = vmul.f32 %v1922, %v1928
      %v1938 = vadd.f32 %v1930, %v1931
      %v1939 = vadd.f32 %v1938, %v1932
      %v1940 = vadd.f32 %v1939, %v1933
      %v1941 = vadd.f32 %v1940, %v1934
      %v1942 = vadd.f32 %v1941, %v1935
      %v1943 = vadd.f32 %v1942, %v1936
      %v1944 = vadd.f32 %v1943, %v1937
      %1945 = vadd.xlane.f32.xlu0 %v1944
      %v1946 = vpop.xlane.xlu0 %1945
      %v1947 = vrot.slane %v1946, 4
      %v1948 = vadd.f32 %v1946, %v1947
      %v1949 = vrot.slane %v1948, 2
      %v1950 = vadd.f32 %v1948, %v1949
      %v1951 = vrot.slane %v1950, 1
      %v1952 = vadd.f32 %v1950, %v1951
      %s1953 = vtos %v1952
      %v1954 = vld [vmem:[%s475] sm:$0x1]
      %v1955 = vstv %s1953
      %v1956 = vadd.f32 %v1954, %v1955
      %vm1957 = vcmask 0
      %1958 = vst.msk [vmem:[%s475] sm:$0x1] %vm1957, %v1956
      %s1959 = smul.u32 8, %s27
      %p1960 = scmp.lt.s32.totalorder %s26, 2
      %s1961 = scalar_select %p1960, %s26, 2
      %p1962 = scmp.lt.s32.totalorder %s1959, 15
      %s1963 = scalar_select %p1962, %s1959, 15
      %s1964 = smul.addr %s1961, 16
      %s1965 = sadd.s32 %s1963, %s1964
      %s1966 = smul.addr %s1965, 8
      %s1967 = scalar_lea.vmem %s9, %s1966
      %p1968 = scmp.lt.s32.totalorder %s26, 2
      %s1969 = scalar_select %p1968, %s26, 2
      %s1970 = scalar_lea.vmem %s10, %s1969
      // Predicated region
      $region61: #{tpu_custom_call.1} parent=55 // pred_check
        %p1971 = pneg %p270
      $region62: #{tpu_custom_call.1} parent=55 // pred_check_branch
        %1973 = sbr.rel (%p1971) target = $region64
      $region63: #{tpu_custom_call.1} parent=55 // pred_region
        %s1974 = smul.u32 8, %s27
      $region64: #{tpu_custom_call.1} parent=55 // pred_fallthru
        _
      // Predicated region
      $region65: #{tpu_custom_call.1} parent=55 // pred_check
        %p1975 = pneg %p296
      $region66: #{tpu_custom_call.1} parent=55 // pred_check_branch
        %1977 = sbr.rel (%p1975) target = $region68
      $region67: #{tpu_custom_call.1} parent=55 // pred_region
        _
      $region68: #{tpu_custom_call.1} parent=55 // pred_fallthru
        _
    $region56: #{tpu_custom_call.1} parent=5 // pred_fallthru
      _
    %p1978 = scmp.le.s32.totalorder 2, %s17
    // Predicated region
    $region69: #{tpu_custom_call.1} parent=5 // pred_check
      %p1979 = pneg %p1978
    $region70: #{tpu_custom_call.1} parent=5 // pred_check_branch
      %1981 = sbr.rel (%p1979) target = $region72
    $region71: #{tpu_custom_call.1} parent=5 // pred_region
      %s1982 = ssub.s32 %s17, 2
      // Predicated region
      $region73: #{tpu_custom_call.1} parent=71 // pred_check
        %p1983 = pneg %p276
      $region74: #{tpu_custom_call.1} parent=71 // pred_check_branch
        %1985 = sbr.rel (%p1983) target = $region76
      $region75: #{tpu_custom_call.1} parent=71 // pred_region
        %s1986 = smul.u32 8, %s29
        %p1987 = scmp.lt.s32.totalorder %s28, 2
        %s1988 = scalar_select %p1987, %s28, 2
        %p1989 = scmp.lt.s32.totalorder %s1986, 15
        %s1990 = scalar_select %p1989, %s1986, 15
        %s1991 = smul.addr %s1988, 16
        %s1992 = sadd.s32 %s1990, %s1991
        %s1993 = smul.addr %s1992, 8
        %s1994 = scalar_lea.vmem %s9, %s1993
      $region76: #{tpu_custom_call.1} parent=71 // pred_fallthru
        _
      // Predicated region
      $region77: #{tpu_custom_call.1} parent=71 // pred_check
        %p1995 = pneg %p302
      $region78: #{tpu_custom_call.1} parent=71 // pred_check_branch
        %1997 = sbr.rel (%p1995) target = $region80
      $region79: #{tpu_custom_call.1} parent=71 // pred_region
        %p1998 = scmp.lt.s32.totalorder %s28, 2
        %s1999 = scalar_select %p1998, %s28, 2
        %s2000 = scalar_lea.vmem %s10, %s1999
      $region80: #{tpu_custom_call.1} parent=71 // pred_fallthru
        _
    $region72: #{tpu_custom_call.1} parent=5 // pred_fallthru
      _
  $region6: #{tpu_custom_call.1} parent=0 // loop_footer
    %s21 = sadd.s32 1, %s17
  $region7: #{tpu_custom_call.1} parent=0 // loop_footer_branch
    %16 = sbr.rel target = $region3
  $region8: #{tpu_custom_call.1} parent=0 // loop_exit
    _

</llo_original>
